<compile_context>
chip_gen: v7x
topology: tpu7x:2x2x1
jax: 0.10.0
libtpu: 0.0.40
codegen_flags: <defaults>
</compile_context>

<pallas_src>
import functools

import numpy as np
import jax
import jax.numpy as jnp
from jax import lax
from jax.experimental import pallas as pl
from jax.experimental.pallas import tpu as pltpu


def _cdiv(a, b):
    return -(-a // b)


def _cbam_kernel(x_ref, w1t_ref, b1_ref, w2_ref, b2_ref, cmask_ref, tapw_ref,
                 o_ref, *, W, pad, Bt):
    C, HW = x_ref.shape[1], x_ref.shape[2]
    inv_hw = 1.0 / HW
    inv_c = 1.0 / C

    w1t = w1t_ref[...]            # (C, Ch) == W1.T
    b1 = b1_ref[...]              # (1, Ch)
    w2 = w2_ref[...]              # (C, Ch)
    b2 = b2_ref[...]              # (C, 1)

    # ---- CAM: channel attention (tiny 2-D VPU math per batch row) ----------
    xs, cams, pooled_max, pooled_avg = [], [], [], []
    for b in range(Bt):
        xb = x_ref[b]                                          # (C, HW)
        mx = jnp.max(xb, axis=1, keepdims=True)                # (C, 1)
        av = jnp.sum(xb, axis=1, keepdims=True) * inv_hw       # (C, 1)
        # relu(W1 v + b1) for both pooled vectors (ReLU is nonlinear), second
        # linear layer fused across the branches: W2 (hm + ha) + 2 b2.
        hm = jnp.maximum(jnp.sum(mx * w1t, axis=0, keepdims=True) + b1, 0.0)
        ha = jnp.maximum(jnp.sum(av * w1t, axis=0, keepdims=True) + b1, 0.0)
        logits = jnp.sum(w2 * (hm + ha), axis=1, keepdims=True) + 2.0 * b2
        cam = jax.nn.sigmoid(logits) * xb                      # (C, HW)
        xs.append(xb)
        cams.append(cam)
        pooled_max.append(jnp.max(cam, axis=0, keepdims=True))            # (1, HW)
        pooled_avg.append(jnp.sum(cam, axis=0, keepdims=True) * inv_c)    # (1, HW)

    # ---- SAM: 7x7 conv as a 49-tap shifted stencil --------------------------
    # Stack [max maps of all rows | avg maps of all rows] on sublanes and
    # zero-pad the lane axis once; every tap is one static value slice.
    pmaps = jnp.concatenate(pooled_max + pooled_avg, axis=0)   # (2*Bt, HW)
    zpad = jnp.zeros((2 * Bt, pad), jnp.float32)
    padded = jnp.concatenate([zpad, pmaps, zpad], axis=1)      # (2*Bt, HW + 2*pad)

    cmask = cmask_ref[...]                                     # (7, HW)
    row_is_max = lax.broadcasted_iota(jnp.int32, (2 * Bt, 1), 0) < Bt

    acc = jnp.zeros((2 * Bt, HW), jnp.float32)
    for dj in range(-3, 4):
        acc_dj = jnp.zeros((2 * Bt, HW), jnp.float32)
        for di in range(-3, 4):
            t = (di + 3) * 7 + (dj + 3)
            st = pad + di * W + dj                    # static lane offset
            win = padded[:, st:st + HW]               # (2*Bt, HW): one window/tap
            # Per-row tap weight: wmax[t] on max rows, wavg[t] on avg rows
            # (scalars read from SMEM, broadcast on the VPU).
            w_col = jnp.where(row_is_max, tapw_ref[0, t], tapw_ref[1, t])
            acc_dj = acc_dj + win * w_col
        if dj == 0:
            acc = acc + acc_dj                        # column mask is all-ones
        else:
            acc = acc + acc_dj * cmask[dj + 3:dj + 4, :]

    # Combine the max-map and avg-map halves per batch row -> conv output.
    gate_s = jax.nn.sigmoid(acc[:Bt, :] + acc[Bt:, :])          # (Bt, HW)

    # ---- CBAM residual -------------------------------------------------------
    for b in range(Bt):
        o_ref[b, :, :] = gate_s[b:b + 1, :] * cams[b] + xs[b]


def cbam_pallas(x, w1, b1, w2, b2, conv_w, batch_block=None):
    """x: (B, C, H, W) float32 NCHW, same convention as the PyTorch module."""
    B, C, H, W = x.shape
    HW = H * W
    Ch = w1.shape[0]

    # Zero pad on each side of the flattened map.  Row overflow of the 7x7
    # window must land in the zero pad: pad >= 3*W + 3.  (The padded map is a
    # value, not a scratch write, so no lane-alignment requirement on pad.)
    pad = 3 * W + 3
    assert pad >= 3 * W + 3, "stencil pad must cover the 7x7 window overflow"

    # Batch rows per grid step.  Default keeps the grid length at 2 so both
    # v7x TensorCores get a step under dimension_semantics=("parallel",),
    # while amortizing per-step overhead on single-TC v5e/v6e as B grows.
    if batch_block is None:
        batch_block = max(1, _cdiv(B, 2))
    Bt = min(int(batch_block), B)
    steps = _cdiv(B, Bt)
    B_pad = steps * Bt

    x_flat = jnp.asarray(x, jnp.float32).reshape(B, C, HW)
    if B_pad > B:
        x_flat = jnp.concatenate(
            [x_flat, jnp.zeros((B_pad - B, C, HW), jnp.float32)], axis=0)

    w1t = jnp.asarray(w1, jnp.float32).T                       # (C, Ch)
    b1r = jnp.asarray(b1, jnp.float32).reshape(1, Ch)
    w2m = jnp.asarray(w2, jnp.float32)                         # (C, Ch)
    b2c = jnp.asarray(b2, jnp.float32).reshape(C, 1)

    # Column-validity mask per horizontal offset dj in [-3, 3]: kills taps
    # whose column index falls off the left/right image edge.
    col = np.arange(HW) % W
    cmask = np.stack(
        [((col + dj >= 0) & (col + dj < W)).astype(np.float32)
         for dj in range(-3, 4)])                              # (7, HW)
    cmask_j = jnp.asarray(cmask)

    # Tap weights as SMEM scalars: row 0 -> max map, row 1 -> avg map.
    tapw = jnp.asarray(conv_w, jnp.float32).reshape(2, 49)

    kernel = functools.partial(_cbam_kernel, W=W, pad=pad, Bt=Bt)

    out_flat = pl.pallas_call(
        kernel,
        out_shape=jax.ShapeDtypeStruct((B_pad, C, HW), jnp.float32),
        grid=(steps,),
        in_specs=[
            pl.BlockSpec((Bt, C, HW), lambda g: (g, 0, 0)),      # x (Bt batch rows)
            pl.BlockSpec((C, Ch), lambda g: (0, 0)),             # W1.T
            pl.BlockSpec((1, Ch), lambda g: (0, 0)),             # b1
            pl.BlockSpec((C, Ch), lambda g: (0, 0)),             # W2
            pl.BlockSpec((C, 1), lambda g: (0, 0)),              # b2
            pl.BlockSpec((7, HW), lambda g: (0, 0)),             # column-validity mask
            pl.BlockSpec(memory_space=pltpu.MemorySpace.SMEM),   # tap weights (2, 49)
        ],
        out_specs=pl.BlockSpec((Bt, C, HW), lambda g: (g, 0, 0)),
        compiler_params=pltpu.CompilerParams(
            dimension_semantics=("parallel",)),
    )(x_flat, w1t, b1r, w2m, b2c, cmask_j, tapw)
    return out_flat[:B].reshape(B, C, H, W)


def cbam_reference(x, w1, b1, w2, b2, conv_w):
    """Pure-JAX reference matching the PyTorch forward exactly."""
    hi = lax.Precision.HIGHEST
    mx = jnp.max(x, axis=(2, 3))
    av = jnp.mean(x, axis=(2, 3))

    def mlp(v):
        h = jnp.maximum(jnp.dot(v, w1.T, precision=hi) + b1, 0.0)
        return jnp.dot(h, w2.T, precision=hi) + b2

    gate_c = jax.nn.sigmoid(mlp(mx) + mlp(av))[:, :, None, None]
    cam = gate_c * x
    ch_max = jnp.max(cam, axis=1, keepdims=True)
    ch_avg = jnp.mean(cam, axis=1, keepdims=True)
    s_in = jnp.concatenate([ch_max, ch_avg], axis=1)
    conv = lax.conv_general_dilated(
        s_in, conv_w, window_strides=(1, 1), padding=((3, 3), (3, 3)),
        dimension_numbers=("NCHW", "OIHW", "NCHW"), precision=hi)
    return jax.nn.sigmoid(conv) * cam + x


if __name__ == "__main__":
    B, C, r, H, W = 2, 8, 2, 16, 16
    Ch = C // r

    key = jax.random.PRNGKey(0)
    kx, k1, k2, k3, k4, k5 = jax.random.split(key, 6)

    x = jax.random.normal(kx, (B, C, H, W), dtype=jnp.float32)

    # Deterministic, PyTorch-default-style uniform init (+-1/sqrt(fan_in)).
    lim1 = 1.0 / np.sqrt(C)
    lim2 = 1.0 / np.sqrt(Ch)
    limc = 1.0 / np.sqrt(2 * 7 * 7)
    w1 = jax.random.uniform(k1, (Ch, C), jnp.float32, -lim1, lim1)
    b1 = jax.random.uniform(k2, (Ch,), jnp.float32, -lim1, lim1)
    w2 = jax.random.uniform(k3, (C, Ch), jnp.float32, -lim2, lim2)
    b2 = jax.random.uniform(k4, (C,), jnp.float32, -lim2, lim2)
    conv_w = jax.random.uniform(k5, (1, 2, 7, 7), jnp.float32, -limc, limc)

    out = jax.block_until_ready(cbam_pallas(x, w1, b1, w2, b2, conv_w))

    ref = cbam_reference(x, w1, b1, w2, b2, conv_w)
    np.testing.assert_allclose(np.asarray(out), np.asarray(ref),
                               atol=1e-3, rtol=1e-3)

    print("KERNEL_OK")
</pallas_src>

<mosaic_0001>
module attributes {stable_mosaic.version = 11 : i64} {
  func.func @_cbam_kernel(%arg0: i32, %arg1: memref<1x8x256xf32, #tpu.memory_space<vmem>>, %arg2: memref<8x4xf32, #tpu.memory_space<vmem>>, %arg3: memref<1x4xf32, #tpu.memory_space<vmem>>, %arg4: memref<8x4xf32, #tpu.memory_space<vmem>>, %arg5: memref<8x1xf32, #tpu.memory_space<vmem>>, %arg6: memref<7x256xf32, #tpu.memory_space<vmem>>, %arg7: memref<2x49xf32, #tpu.memory_space<smem>>, %arg8: memref<1x8x256xf32, #tpu.memory_space<vmem>>) attributes {dimension_semantics = [#tpu.dimension_semantics<parallel>], iteration_bounds = array<i64: 2>, scalar_prefetch = 0 : i64, scratch_operands = 0 : i64, tpu.core_type = #tpu.core_type<tc>, window_params = [{transform_indices = @transform_0, window_bounds = array<i64: 1, 8, 256>}, {pipeline_mode = #tpu.pipeline_mode<synchronous>, transform_indices = @transform_1, window_bounds = array<i64: 8, 4>}, {pipeline_mode = #tpu.pipeline_mode<synchronous>, transform_indices = @transform_2, window_bounds = array<i64: 1, 4>}, {pipeline_mode = #tpu.pipeline_mode<synchronous>, transform_indices = @transform_3, window_bounds = array<i64: 8, 4>}, {pipeline_mode = #tpu.pipeline_mode<synchronous>, transform_indices = @transform_4, window_bounds = array<i64: 8, 1>}, {pipeline_mode = #tpu.pipeline_mode<synchronous>, transform_indices = @transform_5, window_bounds = array<i64: 7, 256>}, {transform_indices = @transform_6, window_bounds = array<i64: 2, 49>}, {transform_indices = @transform_7, window_bounds = array<i64: 1, 8, 256>}]} {
    %c0 = arith.constant 0 : index
    %c0_0 = arith.constant 0 : index
    %0 = vector.load %arg2[%c0, %c0_0] : memref<8x4xf32, #tpu.memory_space<vmem>>, vector<8x4xf32>
    %c0_1 = arith.constant 0 : index
    %c0_2 = arith.constant 0 : index
    %1 = vector.load %arg3[%c0_1, %c0_2] : memref<1x4xf32, #tpu.memory_space<vmem>>, vector<1x4xf32>
    %c0_3 = arith.constant 0 : index
    %c0_4 = arith.constant 0 : index
    %2 = vector.load %arg4[%c0_3, %c0_4] : memref<8x4xf32, #tpu.memory_space<vmem>>, vector<8x4xf32>
    %c0_5 = arith.constant 0 : index
    %c0_6 = arith.constant 0 : index
    %3 = vector.load %arg5[%c0_5, %c0_6] : memref<8x1xf32, #tpu.memory_space<vmem>>, vector<8x1xf32>
    %c0_7 = arith.constant 0 : index
    %c0_8 = arith.constant 0 : index
    %c0_9 = arith.constant 0 : index
    %4 = vector.load %arg1[%c0_7, %c0_8, %c0_9] : memref<1x8x256xf32, #tpu.memory_space<vmem>>, vector<1x8x256xf32>
    %5 = vector.shape_cast %4 : vector<1x8x256xf32> to vector<8x256xf32>
    %cst = arith.constant dense<0xFF800000> : vector<8xf32>
    %6 = vector.multi_reduction <maximumf>, %5, %cst [1] : vector<8x256xf32> to vector<8xf32>
    %7 = vector.shape_cast %6 : vector<8xf32> to vector<8x1xf32>
    %cst_10 = arith.constant dense<0.000000e+00> : vector<8xf32>
    %8 = vector.multi_reduction <add>, %5, %cst_10 [1] : vector<8x256xf32> to vector<8xf32>
    %9 = vector.shape_cast %8 : vector<8xf32> to vector<8x1xf32>
    %cst_11 = arith.constant 3.906250e-03 : f32
    %10 = vector.broadcast %cst_11 : f32 to vector<8x1xf32>
    %11 = arith.mulf %9, %10 : vector<8x1xf32>
    %12 = vector.broadcast %7 : vector<8x1xf32> to vector<8x4xf32>
    %13 = arith.mulf %12, %0 : vector<8x4xf32>
    %cst_12 = arith.constant dense<0.000000e+00> : vector<4xf32>
    %14 = vector.multi_reduction <add>, %13, %cst_12 [0] : vector<8x4xf32> to vector<4xf32>
    %15 = vector.shape_cast %14 : vector<4xf32> to vector<1x4xf32>
    %16 = arith.addf %15, %1 : vector<1x4xf32>
    %cst_13 = arith.constant 0.000000e+00 : f32
    %17 = vector.broadcast %cst_13 : f32 to vector<1x4xf32>
    %18 = arith.maximumf %16, %17 : vector<1x4xf32>
    %19 = vector.broadcast %11 : vector<8x1xf32> to vector<8x4xf32>
    %20 = arith.mulf %19, %0 : vector<8x4xf32>
    %cst_14 = arith.constant dense<0.000000e+00> : vector<4xf32>
    %21 = vector.multi_reduction <add>, %20, %cst_14 [0] : vector<8x4xf32> to vector<4xf32>
    %22 = vector.shape_cast %21 : vector<4xf32> to vector<1x4xf32>
    %23 = arith.addf %22, %1 : vector<1x4xf32>
    %cst_15 = arith.constant 0.000000e+00 : f32
    %24 = vector.broadcast %cst_15 : f32 to vector<1x4xf32>
    %25 = arith.maximumf %23, %24 : vector<1x4xf32>
    %26 = arith.addf %18, %25 : vector<1x4xf32>
    %27 = vector.broadcast %26 : vector<1x4xf32> to vector<8x4xf32>
    %28 = arith.mulf %2, %27 : vector<8x4xf32>
    %cst_16 = arith.constant dense<0.000000e+00> : vector<8xf32>
    %29 = vector.multi_reduction <add>, %28, %cst_16 [1] : vector<8x4xf32> to vector<8xf32>
    %30 = vector.shape_cast %29 : vector<8xf32> to vector<8x1xf32>
    %cst_17 = arith.constant 2.000000e+00 : f32
    %31 = vector.broadcast %cst_17 : f32 to vector<8x1xf32>
    %32 = arith.mulf %31, %3 : vector<8x1xf32>
    %33 = arith.addf %30, %32 : vector<8x1xf32>
    %34 = arith.negf %33 : vector<8x1xf32>
    %35 = math.exp %34 : vector<8x1xf32>
    %cst_18 = arith.constant 1.000000e+00 : f32
    %36 = vector.broadcast %cst_18 : f32 to vector<8x1xf32>
    %37 = arith.addf %36, %35 : vector<8x1xf32>
    %38 = arith.divf %36, %37 : vector<8x1xf32>
    %39 = vector.broadcast %38 : vector<8x1xf32> to vector<8x256xf32>
    %40 = arith.mulf %39, %5 : vector<8x256xf32>
    %cst_19 = arith.constant dense<0xFF800000> : vector<256xf32>
    %41 = vector.multi_reduction <maximumf>, %40, %cst_19 [0] : vector<8x256xf32> to vector<256xf32>
    %42 = vector.shape_cast %41 : vector<256xf32> to vector<1x256xf32>
    %cst_20 = arith.constant dense<0.000000e+00> : vector<256xf32>
    %43 = vector.multi_reduction <add>, %40, %cst_20 [0] : vector<8x256xf32> to vector<256xf32>
    %44 = vector.shape_cast %43 : vector<256xf32> to vector<1x256xf32>
    %cst_21 = arith.constant 1.250000e-01 : f32
    %45 = vector.broadcast %cst_21 : f32 to vector<1x256xf32>
    %46 = arith.mulf %44, %45 : vector<1x256xf32>
    %47 = tpu.concatenate %42, %46 in 0 : vector<1x256xf32>, vector<1x256xf32> -> vector<2x256xf32>
    %cst_22 = arith.constant 0.000000e+00 : f32
    %48 = vector.broadcast %cst_22 : f32 to vector<2x51xf32>
    %49 = tpu.concatenate %48, %47, %48 in 1 : vector<2x51xf32>, vector<2x256xf32>, vector<2x51xf32> -> vector<2x358xf32>
    %c0_23 = arith.constant 0 : index
    %c0_24 = arith.constant 0 : index
    %50 = vector.load %arg6[%c0_23, %c0_24] : memref<7x256xf32, #tpu.memory_space<vmem>>, vector<7x256xf32>
    %51 = tpu.iota {dimensions = array<i32: 0>} : vector<2x1xi32>
    %c1_i32 = arith.constant 1 : i32
    %52 = vector.broadcast %c1_i32 : i32 to vector<2x1xi32>
    %53 = arith.cmpi slt, %51, %52 : vector<2x1xi32>
    %cst_25 = arith.constant 0.000000e+00 : f32
    %54 = vector.broadcast %cst_25 : f32 to vector<2x256xf32>
    %cst_26 = arith.constant 0.000000e+00 : f32
    %55 = vector.broadcast %cst_26 : f32 to vector<2x256xf32>
    %56 = vector.extract_strided_slice %49 {offsets = [0, 0], sizes = [2, 256], strides = [1, 1]} : vector<2x358xf32> to vector<2x256xf32>
    %c0_27 = arith.constant 0 : index
    %c0_28 = arith.constant 0 : index
    %57 = memref.load %arg7[%c0_27, %c0_28] : memref<2x49xf32, #tpu.memory_space<smem>>
    %c1 = arith.constant 1 : index
    %c0_29 = arith.constant 0 : index
    %58 = memref.load %arg7[%c1, %c0_29] : memref<2x49xf32, #tpu.memory_space<smem>>
    %59 = vector.broadcast %57 : f32 to vector<2x1xf32>
    %60 = vector.broadcast %58 : f32 to vector<2x1xf32>
    %61 = arith.select %53, %59, %60 : vector<2x1xi1>, vector<2x1xf32>
    %62 = vector.broadcast %61 : vector<2x1xf32> to vector<2x256xf32>
    %63 = arith.mulf %56, %62 : vector<2x256xf32>
    %64 = arith.addf %55, %63 : vector<2x256xf32>
    %65 = vector.extract_strided_slice %49 {offsets = [0, 16], sizes = [2, 256], strides = [1, 1]} : vector<2x358xf32> to vector<2x256xf32>
    %c0_30 = arith.constant 0 : index
    %c7 = arith.constant 7 : index
    %66 = memref.load %arg7[%c0_30, %c7] : memref<2x49xf32, #tpu.memory_space<smem>>
    %c1_31 = arith.constant 1 : index
    %c7_32 = arith.constant 7 : index
    %67 = memref.load %arg7[%c1_31, %c7_32] : memref<2x49xf32, #tpu.memory_space<smem>>
    %68 = vector.broadcast %66 : f32 to vector<2x1xf32>
    %69 = vector.broadcast %67 : f32 to vector<2x1xf32>
    %70 = arith.select %53, %68, %69 : vector<2x1xi1>, vector<2x1xf32>
    %71 = vector.broadcast %70 : vector<2x1xf32> to vector<2x256xf32>
    %72 = arith.mulf %65, %71 : vector<2x256xf32>
    %73 = arith.addf %64, %72 : vector<2x256xf32>
    %74 = vector.extract_strided_slice %49 {offsets = [0, 32], sizes = [2, 256], strides = [1, 1]} : vector<2x358xf32> to vector<2x256xf32>
    %c0_33 = arith.constant 0 : index
    %c14 = arith.constant 14 : index
    %75 = memref.load %arg7[%c0_33, %c14] : memref<2x49xf32, #tpu.memory_space<smem>>
    %c1_34 = arith.constant 1 : index
    %c14_35 = arith.constant 14 : index
    %76 = memref.load %arg7[%c1_34, %c14_35] : memref<2x49xf32, #tpu.memory_space<smem>>
    %77 = vector.broadcast %75 : f32 to vector<2x1xf32>
    %78 = vector.broadcast %76 : f32 to vector<2x1xf32>
    %79 = arith.select %53, %77, %78 : vector<2x1xi1>, vector<2x1xf32>
    %80 = vector.broadcast %79 : vector<2x1xf32> to vector<2x256xf32>
    %81 = arith.mulf %74, %80 : vector<2x256xf32>
    %82 = arith.addf %73, %81 : vector<2x256xf32>
    %83 = vector.extract_strided_slice %49 {offsets = [0, 48], sizes = [2, 256], strides = [1, 1]} : vector<2x358xf32> to vector<2x256xf32>
    %c0_36 = arith.constant 0 : index
    %c21 = arith.constant 21 : index
    %84 = memref.load %arg7[%c0_36, %c21] : memref<2x49xf32, #tpu.memory_space<smem>>
    %c1_37 = arith.constant 1 : index
    %c21_38 = arith.constant 21 : index
    %85 = memref.load %arg7[%c1_37, %c21_38] : memref<2x49xf32, #tpu.memory_space<smem>>
    %86 = vector.broadcast %84 : f32 to vector<2x1xf32>
    %87 = vector.broadcast %85 : f32 to vector<2x1xf32>
    %88 = arith.select %53, %86, %87 : vector<2x1xi1>, vector<2x1xf32>
    %89 = vector.broadcast %88 : vector<2x1xf32> to vector<2x256xf32>
    %90 = arith.mulf %83, %89 : vector<2x256xf32>
    %91 = arith.addf %82, %90 : vector<2x256xf32>
    %92 = vector.extract_strided_slice %49 {offsets = [0, 64], sizes = [2, 256], strides = [1, 1]} : vector<2x358xf32> to vector<2x256xf32>
    %c0_39 = arith.constant 0 : index
    %c28 = arith.constant 28 : index
    %93 = memref.load %arg7[%c0_39, %c28] : memref<2x49xf32, #tpu.memory_space<smem>>
    %c1_40 = arith.constant 1 : index
    %c28_41 = arith.constant 28 : index
    %94 = memref.load %arg7[%c1_40, %c28_41] : memref<2x49xf32, #tpu.memory_space<smem>>
    %95 = vector.broadcast %93 : f32 to vector<2x1xf32>
    %96 = vector.broadcast %94 : f32 to vector<2x1xf32>
    %97 = arith.select %53, %95, %96 : vector<2x1xi1>, vector<2x1xf32>
    %98 = vector.broadcast %97 : vector<2x1xf32> to vector<2x256xf32>
    %99 = arith.mulf %92, %98 : vector<2x256xf32>
    %100 = arith.addf %91, %99 : vector<2x256xf32>
    %101 = vector.extract_strided_slice %49 {offsets = [0, 80], sizes = [2, 256], strides = [1, 1]} : vector<2x358xf32> to vector<2x256xf32>
    %c0_42 = arith.constant 0 : index
    %c35 = arith.constant 35 : index
    %102 = memref.load %arg7[%c0_42, %c35] : memref<2x49xf32, #tpu.memory_space<smem>>
    %c1_43 = arith.constant 1 : index
    %c35_44 = arith.constant 35 : index
    %103 = memref.load %arg7[%c1_43, %c35_44] : memref<2x49xf32, #tpu.memory_space<smem>>
    %104 = vector.broadcast %102 : f32 to vector<2x1xf32>
    %105 = vector.broadcast %103 : f32 to vector<2x1xf32>
    %106 = arith.select %53, %104, %105 : vector<2x1xi1>, vector<2x1xf32>
    %107 = vector.broadcast %106 : vector<2x1xf32> to vector<2x256xf32>
    %108 = arith.mulf %101, %107 : vector<2x256xf32>
    %109 = arith.addf %100, %108 : vector<2x256xf32>
    %110 = vector.extract_strided_slice %49 {offsets = [0, 96], sizes = [2, 256], strides = [1, 1]} : vector<2x358xf32> to vector<2x256xf32>
    %c0_45 = arith.constant 0 : index
    %c42 = arith.constant 42 : index
    %111 = memref.load %arg7[%c0_45, %c42] : memref<2x49xf32, #tpu.memory_space<smem>>
    %c1_46 = arith.constant 1 : index
    %c42_47 = arith.constant 42 : index
    %112 = memref.load %arg7[%c1_46, %c42_47] : memref<2x49xf32, #tpu.memory_space<smem>>
    %113 = vector.broadcast %111 : f32 to vector<2x1xf32>
    %114 = vector.broadcast %112 : f32 to vector<2x1xf32>
    %115 = arith.select %53, %113, %114 : vector<2x1xi1>, vector<2x1xf32>
    %116 = vector.broadcast %115 : vector<2x1xf32> to vector<2x256xf32>
    %117 = arith.mulf %110, %116 : vector<2x256xf32>
    %118 = arith.addf %109, %117 : vector<2x256xf32>
    %119 = vector.extract_strided_slice %50 {offsets = [0, 0], sizes = [1, 256], strides = [1, 1]} : vector<7x256xf32> to vector<1x256xf32>
    %120 = vector.broadcast %119 : vector<1x256xf32> to vector<2x256xf32>
    %121 = arith.mulf %118, %120 : vector<2x256xf32>
    %122 = arith.addf %54, %121 : vector<2x256xf32>
    %cst_48 = arith.constant 0.000000e+00 : f32
    %123 = vector.broadcast %cst_48 : f32 to vector<2x256xf32>
    %124 = vector.extract_strided_slice %49 {offsets = [0, 1], sizes = [2, 256], strides = [1, 1]} : vector<2x358xf32> to vector<2x256xf32>
    %c0_49 = arith.constant 0 : index
    %c1_50 = arith.constant 1 : index
    %125 = memref.load %arg7[%c0_49, %c1_50] : memref<2x49xf32, #tpu.memory_space<smem>>
    %c1_51 = arith.constant 1 : index
    %c1_52 = arith.constant 1 : index
    %126 = memref.load %arg7[%c1_51, %c1_52] : memref<2x49xf32, #tpu.memory_space<smem>>
    %127 = vector.broadcast %125 : f32 to vector<2x1xf32>
    %128 = vector.broadcast %126 : f32 to vector<2x1xf32>
    %129 = arith.select %53, %127, %128 : vector<2x1xi1>, vector<2x1xf32>
    %130 = vector.broadcast %129 : vector<2x1xf32> to vector<2x256xf32>
    %131 = arith.mulf %124, %130 : vector<2x256xf32>
    %132 = arith.addf %123, %131 : vector<2x256xf32>
    %133 = vector.extract_strided_slice %49 {offsets = [0, 17], sizes = [2, 256], strides = [1, 1]} : vector<2x358xf32> to vector<2x256xf32>
    %c0_53 = arith.constant 0 : index
    %c8 = arith.constant 8 : index
    %134 = memref.load %arg7[%c0_53, %c8] : memref<2x49xf32, #tpu.memory_space<smem>>
    %c1_54 = arith.constant 1 : index
    %c8_55 = arith.constant 8 : index
    %135 = memref.load %arg7[%c1_54, %c8_55] : memref<2x49xf32, #tpu.memory_space<smem>>
    %136 = vector.broadcast %134 : f32 to vector<2x1xf32>
    %137 = vector.broadcast %135 : f32 to vector<2x1xf32>
    %138 = arith.select %53, %136, %137 : vector<2x1xi1>, vector<2x1xf32>
    %139 = vector.broadcast %138 : vector<2x1xf32> to vector<2x256xf32>
    %140 = arith.mulf %133, %139 : vector<2x256xf32>
    %141 = arith.addf %132, %140 : vector<2x256xf32>
    %142 = vector.extract_strided_slice %49 {offsets = [0, 33], sizes = [2, 256], strides = [1, 1]} : vector<2x358xf32> to vector<2x256xf32>
    %c0_56 = arith.constant 0 : index
    %c15 = arith.constant 15 : index
    %143 = memref.load %arg7[%c0_56, %c15] : memref<2x49xf32, #tpu.memory_space<smem>>
    %c1_57 = arith.constant 1 : index
    %c15_58 = arith.constant 15 : index
    %144 = memref.load %arg7[%c1_57, %c15_58] : memref<2x49xf32, #tpu.memory_space<smem>>
    %145 = vector.broadcast %143 : f32 to vector<2x1xf32>
    %146 = vector.broadcast %144 : f32 to vector<2x1xf32>
    %147 = arith.select %53, %145, %146 : vector<2x1xi1>, vector<2x1xf32>
    %148 = vector.broadcast %147 : vector<2x1xf32> to vector<2x256xf32>
    %149 = arith.mulf %142, %148 : vector<2x256xf32>
    %150 = arith.addf %141, %149 : vector<2x256xf32>
    %151 = vector.extract_strided_slice %49 {offsets = [0, 49], sizes = [2, 256], strides = [1, 1]} : vector<2x358xf32> to vector<2x256xf32>
    %c0_59 = arith.constant 0 : index
    %c22 = arith.constant 22 : index
    %152 = memref.load %arg7[%c0_59, %c22] : memref<2x49xf32, #tpu.memory_space<smem>>
    %c1_60 = arith.constant 1 : index
    %c22_61 = arith.constant 22 : index
    %153 = memref.load %arg7[%c1_60, %c22_61] : memref<2x49xf32, #tpu.memory_space<smem>>
    %154 = vector.broadcast %152 : f32 to vector<2x1xf32>
    %155 = vector.broadcast %153 : f32 to vector<2x1xf32>
    %156 = arith.select %53, %154, %155 : vector<2x1xi1>, vector<2x1xf32>
    %157 = vector.broadcast %156 : vector<2x1xf32> to vector<2x256xf32>
    %158 = arith.mulf %151, %157 : vector<2x256xf32>
    %159 = arith.addf %150, %158 : vector<2x256xf32>
    %160 = vector.extract_strided_slice %49 {offsets = [0, 65], sizes = [2, 256], strides = [1, 1]} : vector<2x358xf32> to vector<2x256xf32>
    %c0_62 = arith.constant 0 : index
    %c29 = arith.constant 29 : index
    %161 = memref.load %arg7[%c0_62, %c29] : memref<2x49xf32, #tpu.memory_space<smem>>
    %c1_63 = arith.constant 1 : index
    %c29_64 = arith.constant 29 : index
    %162 = memref.load %arg7[%c1_63, %c29_64] : memref<2x49xf32, #tpu.memory_space<smem>>
    %163 = vector.broadcast %161 : f32 to vector<2x1xf32>
    %164 = vector.broadcast %162 : f32 to vector<2x1xf32>
    %165 = arith.select %53, %163, %164 : vector<2x1xi1>, vector<2x1xf32>
    %166 = vector.broadcast %165 : vector<2x1xf32> to vector<2x256xf32>
    %167 = arith.mulf %160, %166 : vector<2x256xf32>
    %168 = arith.addf %159, %167 : vector<2x256xf32>
    %169 = vector.extract_strided_slice %49 {offsets = [0, 81], sizes = [2, 256], strides = [1, 1]} : vector<2x358xf32> to vector<2x256xf32>
    %c0_65 = arith.constant 0 : index
    %c36 = arith.constant 36 : index
    %170 = memref.load %arg7[%c0_65, %c36] : memref<2x49xf32, #tpu.memory_space<smem>>
    %c1_66 = arith.constant 1 : index
    %c36_67 = arith.constant 36 : index
    %171 = memref.load %arg7[%c1_66, %c36_67] : memref<2x49xf32, #tpu.memory_space<smem>>
    %172 = vector.broadcast %170 : f32 to vector<2x1xf32>
    %173 = vector.broadcast %171 : f32 to vector<2x1xf32>
    %174 = arith.select %53, %172, %173 : vector<2x1xi1>, vector<2x1xf32>
    %175 = vector.broadcast %174 : vector<2x1xf32> to vector<2x256xf32>
    %176 = arith.mulf %169, %175 : vector<2x256xf32>
    %177 = arith.addf %168, %176 : vector<2x256xf32>
    %178 = vector.extract_strided_slice %49 {offsets = [0, 97], sizes = [2, 256], strides = [1, 1]} : vector<2x358xf32> to vector<2x256xf32>
    %c0_68 = arith.constant 0 : index
    %c43 = arith.constant 43 : index
    %179 = memref.load %arg7[%c0_68, %c43] : memref<2x49xf32, #tpu.memory_space<smem>>
    %c1_69 = arith.constant 1 : index
    %c43_70 = arith.constant 43 : index
    %180 = memref.load %arg7[%c1_69, %c43_70] : memref<2x49xf32, #tpu.memory_space<smem>>
    %181 = vector.broadcast %179 : f32 to vector<2x1xf32>
    %182 = vector.broadcast %180 : f32 to vector<2x1xf32>
    %183 = arith.select %53, %181, %182 : vector<2x1xi1>, vector<2x1xf32>
    %184 = vector.broadcast %183 : vector<2x1xf32> to vector<2x256xf32>
    %185 = arith.mulf %178, %184 : vector<2x256xf32>
    %186 = arith.addf %177, %185 : vector<2x256xf32>
    %187 = vector.extract_strided_slice %50 {offsets = [1, 0], sizes = [1, 256], strides = [1, 1]} : vector<7x256xf32> to vector<1x256xf32>
    %188 = vector.broadcast %187 : vector<1x256xf32> to vector<2x256xf32>
    %189 = arith.mulf %186, %188 : vector<2x256xf32>
    %190 = arith.addf %122, %189 : vector<2x256xf32>
    %cst_71 = arith.constant 0.000000e+00 : f32
    %191 = vector.broadcast %cst_71 : f32 to vector<2x256xf32>
    %192 = vector.extract_strided_slice %49 {offsets = [0, 2], sizes = [2, 256], strides = [1, 1]} : vector<2x358xf32> to vector<2x256xf32>
    %c0_72 = arith.constant 0 : index
    %c2 = arith.constant 2 : index
    %193 = memref.load %arg7[%c0_72, %c2] : memref<2x49xf32, #tpu.memory_space<smem>>
    %c1_73 = arith.constant 1 : index
    %c2_74 = arith.constant 2 : index
    %194 = memref.load %arg7[%c1_73, %c2_74] : memref<2x49xf32, #tpu.memory_space<smem>>
    %195 = vector.broadcast %193 : f32 to vector<2x1xf32>
    %196 = vector.broadcast %194 : f32 to vector<2x1xf32>
    %197 = arith.select %53, %195, %196 : vector<2x1xi1>, vector<2x1xf32>
    %198 = vector.broadcast %197 : vector<2x1xf32> to vector<2x256xf32>
    %199 = arith.mulf %192, %198 : vector<2x256xf32>
    %200 = arith.addf %191, %199 : vector<2x256xf32>
    %201 = vector.extract_strided_slice %49 {offsets = [0, 18], sizes = [2, 256], strides = [1, 1]} : vector<2x358xf32> to vector<2x256xf32>
    %c0_75 = arith.constant 0 : index
    %c9 = arith.constant 9 : index
    %202 = memref.load %arg7[%c0_75, %c9] : memref<2x49xf32, #tpu.memory_space<smem>>
    %c1_76 = arith.constant 1 : index
    %c9_77 = arith.constant 9 : index
    %203 = memref.load %arg7[%c1_76, %c9_77] : memref<2x49xf32, #tpu.memory_space<smem>>
    %204 = vector.broadcast %202 : f32 to vector<2x1xf32>
    %205 = vector.broadcast %203 : f32 to vector<2x1xf32>
    %206 = arith.select %53, %204, %205 : vector<2x1xi1>, vector<2x1xf32>
    %207 = vector.broadcast %206 : vector<2x1xf32> to vector<2x256xf32>
    %208 = arith.mulf %201, %207 : vector<2x256xf32>
    %209 = arith.addf %200, %208 : vector<2x256xf32>
    %210 = vector.extract_strided_slice %49 {offsets = [0, 34], sizes = [2, 256], strides = [1, 1]} : vector<2x358xf32> to vector<2x256xf32>
    %c0_78 = arith.constant 0 : index
    %c16 = arith.constant 16 : index
    %211 = memref.load %arg7[%c0_78, %c16] : memref<2x49xf32, #tpu.memory_space<smem>>
    %c1_79 = arith.constant 1 : index
    %c16_80 = arith.constant 16 : index
    %212 = memref.load %arg7[%c1_79, %c16_80] : memref<2x49xf32, #tpu.memory_space<smem>>
    %213 = vector.broadcast %211 : f32 to vector<2x1xf32>
    %214 = vector.broadcast %212 : f32 to vector<2x1xf32>
    %215 = arith.select %53, %213, %214 : vector<2x1xi1>, vector<2x1xf32>
    %216 = vector.broadcast %215 : vector<2x1xf32> to vector<2x256xf32>
    %217 = arith.mulf %210, %216 : vector<2x256xf32>
    %218 = arith.addf %209, %217 : vector<2x256xf32>
    %219 = vector.extract_strided_slice %49 {offsets = [0, 50], sizes = [2, 256], strides = [1, 1]} : vector<2x358xf32> to vector<2x256xf32>
    %c0_81 = arith.constant 0 : index
    %c23 = arith.constant 23 : index
    %220 = memref.load %arg7[%c0_81, %c23] : memref<2x49xf32, #tpu.memory_space<smem>>
    %c1_82 = arith.constant 1 : index
    %c23_83 = arith.constant 23 : index
    %221 = memref.load %arg7[%c1_82, %c23_83] : memref<2x49xf32, #tpu.memory_space<smem>>
    %222 = vector.broadcast %220 : f32 to vector<2x1xf32>
    %223 = vector.broadcast %221 : f32 to vector<2x1xf32>
    %224 = arith.select %53, %222, %223 : vector<2x1xi1>, vector<2x1xf32>
    %225 = vector.broadcast %224 : vector<2x1xf32> to vector<2x256xf32>
    %226 = arith.mulf %219, %225 : vector<2x256xf32>
    %227 = arith.addf %218, %226 : vector<2x256xf32>
    %228 = vector.extract_strided_slice %49 {offsets = [0, 66], sizes = [2, 256], strides = [1, 1]} : vector<2x358xf32> to vector<2x256xf32>
    %c0_84 = arith.constant 0 : index
    %c30 = arith.constant 30 : index
    %229 = memref.load %arg7[%c0_84, %c30] : memref<2x49xf32, #tpu.memory_space<smem>>
    %c1_85 = arith.constant 1 : index
    %c30_86 = arith.constant 30 : index
    %230 = memref.load %arg7[%c1_85, %c30_86] : memref<2x49xf32, #tpu.memory_space<smem>>
    %231 = vector.broadcast %229 : f32 to vector<2x1xf32>
    %232 = vector.broadcast %230 : f32 to vector<2x1xf32>
    %233 = arith.select %53, %231, %232 : vector<2x1xi1>, vector<2x1xf32>
    %234 = vector.broadcast %233 : vector<2x1xf32> to vector<2x256xf32>
    %235 = arith.mulf %228, %234 : vector<2x256xf32>
    %236 = arith.addf %227, %235 : vector<2x256xf32>
    %237 = vector.extract_strided_slice %49 {offsets = [0, 82], sizes = [2, 256], strides = [1, 1]} : vector<2x358xf32> to vector<2x256xf32>
    %c0_87 = arith.constant 0 : index
    %c37 = arith.constant 37 : index
    %238 = memref.load %arg7[%c0_87, %c37] : memref<2x49xf32, #tpu.memory_space<smem>>
    %c1_88 = arith.constant 1 : index
    %c37_89 = arith.constant 37 : index
    %239 = memref.load %arg7[%c1_88, %c37_89] : memref<2x49xf32, #tpu.memory_space<smem>>
    %240 = vector.broadcast %238 : f32 to vector<2x1xf32>
    %241 = vector.broadcast %239 : f32 to vector<2x1xf32>
    %242 = arith.select %53, %240, %241 : vector<2x1xi1>, vector<2x1xf32>
    %243 = vector.broadcast %242 : vector<2x1xf32> to vector<2x256xf32>
    %244 = arith.mulf %237, %243 : vector<2x256xf32>
    %245 = arith.addf %236, %244 : vector<2x256xf32>
    %246 = vector.extract_strided_slice %49 {offsets = [0, 98], sizes = [2, 256], strides = [1, 1]} : vector<2x358xf32> to vector<2x256xf32>
    %c0_90 = arith.constant 0 : index
    %c44 = arith.constant 44 : index
    %247 = memref.load %arg7[%c0_90, %c44] : memref<2x49xf32, #tpu.memory_space<smem>>
    %c1_91 = arith.constant 1 : index
    %c44_92 = arith.constant 44 : index
    %248 = memref.load %arg7[%c1_91, %c44_92] : memref<2x49xf32, #tpu.memory_space<smem>>
    %249 = vector.broadcast %247 : f32 to vector<2x1xf32>
    %250 = vector.broadcast %248 : f32 to vector<2x1xf32>
    %251 = arith.select %53, %249, %250 : vector<2x1xi1>, vector<2x1xf32>
    %252 = vector.broadcast %251 : vector<2x1xf32> to vector<2x256xf32>
    %253 = arith.mulf %246, %252 : vector<2x256xf32>
    %254 = arith.addf %245, %253 : vector<2x256xf32>
    %255 = vector.extract_strided_slice %50 {offsets = [2, 0], sizes = [1, 256], strides = [1, 1]} : vector<7x256xf32> to vector<1x256xf32>
    %256 = vector.broadcast %255 : vector<1x256xf32> to vector<2x256xf32>
    %257 = arith.mulf %254, %256 : vector<2x256xf32>
    %258 = arith.addf %190, %257 : vector<2x256xf32>
    %cst_93 = arith.constant 0.000000e+00 : f32
    %259 = vector.broadcast %cst_93 : f32 to vector<2x256xf32>
    %260 = vector.extract_strided_slice %49 {offsets = [0, 3], sizes = [2, 256], strides = [1, 1]} : vector<2x358xf32> to vector<2x256xf32>
    %c0_94 = arith.constant 0 : index
    %c3 = arith.constant 3 : index
    %261 = memref.load %arg7[%c0_94, %c3] : memref<2x49xf32, #tpu.memory_space<smem>>
    %c1_95 = arith.constant 1 : index
    %c3_96 = arith.constant 3 : index
    %262 = memref.load %arg7[%c1_95, %c3_96] : memref<2x49xf32, #tpu.memory_space<smem>>
    %263 = vector.broadcast %261 : f32 to vector<2x1xf32>
    %264 = vector.broadcast %262 : f32 to vector<2x1xf32>
    %265 = arith.select %53, %263, %264 : vector<2x1xi1>, vector<2x1xf32>
    %266 = vector.broadcast %265 : vector<2x1xf32> to vector<2x256xf32>
    %267 = arith.mulf %260, %266 : vector<2x256xf32>
    %268 = arith.addf %259, %267 : vector<2x256xf32>
    %269 = vector.extract_strided_slice %49 {offsets = [0, 19], sizes = [2, 256], strides = [1, 1]} : vector<2x358xf32> to vector<2x256xf32>
    %c0_97 = arith.constant 0 : index
    %c10 = arith.constant 10 : index
    %270 = memref.load %arg7[%c0_97, %c10] : memref<2x49xf32, #tpu.memory_space<smem>>
    %c1_98 = arith.constant 1 : index
    %c10_99 = arith.constant 10 : index
    %271 = memref.load %arg7[%c1_98, %c10_99] : memref<2x49xf32, #tpu.memory_space<smem>>
    %272 = vector.broadcast %270 : f32 to vector<2x1xf32>
    %273 = vector.broadcast %271 : f32 to vector<2x1xf32>
    %274 = arith.select %53, %272, %273 : vector<2x1xi1>, vector<2x1xf32>
    %275 = vector.broadcast %274 : vector<2x1xf32> to vector<2x256xf32>
    %276 = arith.mulf %269, %275 : vector<2x256xf32>
    %277 = arith.addf %268, %276 : vector<2x256xf32>
    %278 = vector.extract_strided_slice %49 {offsets = [0, 35], sizes = [2, 256], strides = [1, 1]} : vector<2x358xf32> to vector<2x256xf32>
    %c0_100 = arith.constant 0 : index
    %c17 = arith.constant 17 : index
    %279 = memref.load %arg7[%c0_100, %c17] : memref<2x49xf32, #tpu.memory_space<smem>>
    %c1_101 = arith.constant 1 : index
    %c17_102 = arith.constant 17 : index
    %280 = memref.load %arg7[%c1_101, %c17_102] : memref<2x49xf32, #tpu.memory_space<smem>>
    %281 = vector.broadcast %279 : f32 to vector<2x1xf32>
    %282 = vector.broadcast %280 : f32 to vector<2x1xf32>
    %283 = arith.select %53, %281, %282 : vector<2x1xi1>, vector<2x1xf32>
    %284 = vector.broadcast %283 : vector<2x1xf32> to vector<2x256xf32>
    %285 = arith.mulf %278, %284 : vector<2x256xf32>
    %286 = arith.addf %277, %285 : vector<2x256xf32>
    %287 = vector.extract_strided_slice %49 {offsets = [0, 51], sizes = [2, 256], strides = [1, 1]} : vector<2x358xf32> to vector<2x256xf32>
    %c0_103 = arith.constant 0 : index
    %c24 = arith.constant 24 : index
    %288 = memref.load %arg7[%c0_103, %c24] : memref<2x49xf32, #tpu.memory_space<smem>>
    %c1_104 = arith.constant 1 : index
    %c24_105 = arith.constant 24 : index
    %289 = memref.load %arg7[%c1_104, %c24_105] : memref<2x49xf32, #tpu.memory_space<smem>>
    %290 = vector.broadcast %288 : f32 to vector<2x1xf32>
    %291 = vector.broadcast %289 : f32 to vector<2x1xf32>
    %292 = arith.select %53, %290, %291 : vector<2x1xi1>, vector<2x1xf32>
    %293 = vector.broadcast %292 : vector<2x1xf32> to vector<2x256xf32>
    %294 = arith.mulf %287, %293 : vector<2x256xf32>
    %295 = arith.addf %286, %294 : vector<2x256xf32>
    %296 = vector.extract_strided_slice %49 {offsets = [0, 67], sizes = [2, 256], strides = [1, 1]} : vector<2x358xf32> to vector<2x256xf32>
    %c0_106 = arith.constant 0 : index
    %c31 = arith.constant 31 : index
    %297 = memref.load %arg7[%c0_106, %c31] : memref<2x49xf32, #tpu.memory_space<smem>>
    %c1_107 = arith.constant 1 : index
    %c31_108 = arith.constant 31 : index
    %298 = memref.load %arg7[%c1_107, %c31_108] : memref<2x49xf32, #tpu.memory_space<smem>>
    %299 = vector.broadcast %297 : f32 to vector<2x1xf32>
    %300 = vector.broadcast %298 : f32 to vector<2x1xf32>
    %301 = arith.select %53, %299, %300 : vector<2x1xi1>, vector<2x1xf32>
    %302 = vector.broadcast %301 : vector<2x1xf32> to vector<2x256xf32>
    %303 = arith.mulf %296, %302 : vector<2x256xf32>
    %304 = arith.addf %295, %303 : vector<2x256xf32>
    %305 = vector.extract_strided_slice %49 {offsets = [0, 83], sizes = [2, 256], strides = [1, 1]} : vector<2x358xf32> to vector<2x256xf32>
    %c0_109 = arith.constant 0 : index
    %c38 = arith.constant 38 : index
    %306 = memref.load %arg7[%c0_109, %c38] : memref<2x49xf32, #tpu.memory_space<smem>>
    %c1_110 = arith.constant 1 : index
    %c38_111 = arith.constant 38 : index
    %307 = memref.load %arg7[%c1_110, %c38_111] : memref<2x49xf32, #tpu.memory_space<smem>>
    %308 = vector.broadcast %306 : f32 to vector<2x1xf32>
    %309 = vector.broadcast %307 : f32 to vector<2x1xf32>
    %310 = arith.select %53, %308, %309 : vector<2x1xi1>, vector<2x1xf32>
    %311 = vector.broadcast %310 : vector<2x1xf32> to vector<2x256xf32>
    %312 = arith.mulf %305, %311 : vector<2x256xf32>
    %313 = arith.addf %304, %312 : vector<2x256xf32>
    %314 = vector.extract_strided_slice %49 {offsets = [0, 99], sizes = [2, 256], strides = [1, 1]} : vector<2x358xf32> to vector<2x256xf32>
    %c0_112 = arith.constant 0 : index
    %c45 = arith.constant 45 : index
    %315 = memref.load %arg7[%c0_112, %c45] : memref<2x49xf32, #tpu.memory_space<smem>>
    %c1_113 = arith.constant 1 : index
    %c45_114 = arith.constant 45 : index
    %316 = memref.load %arg7[%c1_113, %c45_114] : memref<2x49xf32, #tpu.memory_space<smem>>
    %317 = vector.broadcast %315 : f32 to vector<2x1xf32>
    %318 = vector.broadcast %316 : f32 to vector<2x1xf32>
    %319 = arith.select %53, %317, %318 : vector<2x1xi1>, vector<2x1xf32>
    %320 = vector.broadcast %319 : vector<2x1xf32> to vector<2x256xf32>
    %321 = arith.mulf %314, %320 : vector<2x256xf32>
    %322 = arith.addf %313, %321 : vector<2x256xf32>
    %323 = arith.addf %258, %322 : vector<2x256xf32>
    %cst_115 = arith.constant 0.000000e+00 : f32
    %324 = vector.broadcast %cst_115 : f32 to vector<2x256xf32>
    %325 = vector.extract_strided_slice %49 {offsets = [0, 4], sizes = [2, 256], strides = [1, 1]} : vector<2x358xf32> to vector<2x256xf32>
    %c0_116 = arith.constant 0 : index
    %c4 = arith.constant 4 : index
    %326 = memref.load %arg7[%c0_116, %c4] : memref<2x49xf32, #tpu.memory_space<smem>>
    %c1_117 = arith.constant 1 : index
    %c4_118 = arith.constant 4 : index
    %327 = memref.load %arg7[%c1_117, %c4_118] : memref<2x49xf32, #tpu.memory_space<smem>>
    %328 = vector.broadcast %326 : f32 to vector<2x1xf32>
    %329 = vector.broadcast %327 : f32 to vector<2x1xf32>
    %330 = arith.select %53, %328, %329 : vector<2x1xi1>, vector<2x1xf32>
    %331 = vector.broadcast %330 : vector<2x1xf32> to vector<2x256xf32>
    %332 = arith.mulf %325, %331 : vector<2x256xf32>
    %333 = arith.addf %324, %332 : vector<2x256xf32>
    %334 = vector.extract_strided_slice %49 {offsets = [0, 20], sizes = [2, 256], strides = [1, 1]} : vector<2x358xf32> to vector<2x256xf32>
    %c0_119 = arith.constant 0 : index
    %c11 = arith.constant 11 : index
    %335 = memref.load %arg7[%c0_119, %c11] : memref<2x49xf32, #tpu.memory_space<smem>>
    %c1_120 = arith.constant 1 : index
    %c11_121 = arith.constant 11 : index
    %336 = memref.load %arg7[%c1_120, %c11_121] : memref<2x49xf32, #tpu.memory_space<smem>>
    %337 = vector.broadcast %335 : f32 to vector<2x1xf32>
    %338 = vector.broadcast %336 : f32 to vector<2x1xf32>
    %339 = arith.select %53, %337, %338 : vector<2x1xi1>, vector<2x1xf32>
    %340 = vector.broadcast %339 : vector<2x1xf32> to vector<2x256xf32>
    %341 = arith.mulf %334, %340 : vector<2x256xf32>
    %342 = arith.addf %333, %341 : vector<2x256xf32>
    %343 = vector.extract_strided_slice %49 {offsets = [0, 36], sizes = [2, 256], strides = [1, 1]} : vector<2x358xf32> to vector<2x256xf32>
    %c0_122 = arith.constant 0 : index
    %c18 = arith.constant 18 : index
    %344 = memref.load %arg7[%c0_122, %c18] : memref<2x49xf32, #tpu.memory_space<smem>>
    %c1_123 = arith.constant 1 : index
    %c18_124 = arith.constant 18 : index
    %345 = memref.load %arg7[%c1_123, %c18_124] : memref<2x49xf32, #tpu.memory_space<smem>>
    %346 = vector.broadcast %344 : f32 to vector<2x1xf32>
    %347 = vector.broadcast %345 : f32 to vector<2x1xf32>
    %348 = arith.select %53, %346, %347 : vector<2x1xi1>, vector<2x1xf32>
    %349 = vector.broadcast %348 : vector<2x1xf32> to vector<2x256xf32>
    %350 = arith.mulf %343, %349 : vector<2x256xf32>
    %351 = arith.addf %342, %350 : vector<2x256xf32>
    %352 = vector.extract_strided_slice %49 {offsets = [0, 52], sizes = [2, 256], strides = [1, 1]} : vector<2x358xf32> to vector<2x256xf32>
    %c0_125 = arith.constant 0 : index
    %c25 = arith.constant 25 : index
    %353 = memref.load %arg7[%c0_125, %c25] : memref<2x49xf32, #tpu.memory_space<smem>>
    %c1_126 = arith.constant 1 : index
    %c25_127 = arith.constant 25 : index
    %354 = memref.load %arg7[%c1_126, %c25_127] : memref<2x49xf32, #tpu.memory_space<smem>>
    %355 = vector.broadcast %353 : f32 to vector<2x1xf32>
    %356 = vector.broadcast %354 : f32 to vector<2x1xf32>
    %357 = arith.select %53, %355, %356 : vector<2x1xi1>, vector<2x1xf32>
    %358 = vector.broadcast %357 : vector<2x1xf32> to vector<2x256xf32>
    %359 = arith.mulf %352, %358 : vector<2x256xf32>
    %360 = arith.addf %351, %359 : vector<2x256xf32>
    %361 = vector.extract_strided_slice %49 {offsets = [0, 68], sizes = [2, 256], strides = [1, 1]} : vector<2x358xf32> to vector<2x256xf32>
    %c0_128 = arith.constant 0 : index
    %c32 = arith.constant 32 : index
    %362 = memref.load %arg7[%c0_128, %c32] : memref<2x49xf32, #tpu.memory_space<smem>>
    %c1_129 = arith.constant 1 : index
    %c32_130 = arith.constant 32 : index
    %363 = memref.load %arg7[%c1_129, %c32_130] : memref<2x49xf32, #tpu.memory_space<smem>>
    %364 = vector.broadcast %362 : f32 to vector<2x1xf32>
    %365 = vector.broadcast %363 : f32 to vector<2x1xf32>
    %366 = arith.select %53, %364, %365 : vector<2x1xi1>, vector<2x1xf32>
    %367 = vector.broadcast %366 : vector<2x1xf32> to vector<2x256xf32>
    %368 = arith.mulf %361, %367 : vector<2x256xf32>
    %369 = arith.addf %360, %368 : vector<2x256xf32>
    %370 = vector.extract_strided_slice %49 {offsets = [0, 84], sizes = [2, 256], strides = [1, 1]} : vector<2x358xf32> to vector<2x256xf32>
    %c0_131 = arith.constant 0 : index
    %c39 = arith.constant 39 : index
    %371 = memref.load %arg7[%c0_131, %c39] : memref<2x49xf32, #tpu.memory_space<smem>>
    %c1_132 = arith.constant 1 : index
    %c39_133 = arith.constant 39 : index
    %372 = memref.load %arg7[%c1_132, %c39_133] : memref<2x49xf32, #tpu.memory_space<smem>>
    %373 = vector.broadcast %371 : f32 to vector<2x1xf32>
    %374 = vector.broadcast %372 : f32 to vector<2x1xf32>
    %375 = arith.select %53, %373, %374 : vector<2x1xi1>, vector<2x1xf32>
    %376 = vector.broadcast %375 : vector<2x1xf32> to vector<2x256xf32>
    %377 = arith.mulf %370, %376 : vector<2x256xf32>
    %378 = arith.addf %369, %377 : vector<2x256xf32>
    %379 = vector.extract_strided_slice %49 {offsets = [0, 100], sizes = [2, 256], strides = [1, 1]} : vector<2x358xf32> to vector<2x256xf32>
    %c0_134 = arith.constant 0 : index
    %c46 = arith.constant 46 : index
    %380 = memref.load %arg7[%c0_134, %c46] : memref<2x49xf32, #tpu.memory_space<smem>>
    %c1_135 = arith.constant 1 : index
    %c46_136 = arith.constant 46 : index
    %381 = memref.load %arg7[%c1_135, %c46_136] : memref<2x49xf32, #tpu.memory_space<smem>>
    %382 = vector.broadcast %380 : f32 to vector<2x1xf32>
    %383 = vector.broadcast %381 : f32 to vector<2x1xf32>
    %384 = arith.select %53, %382, %383 : vector<2x1xi1>, vector<2x1xf32>
    %385 = vector.broadcast %384 : vector<2x1xf32> to vector<2x256xf32>
    %386 = arith.mulf %379, %385 : vector<2x256xf32>
    %387 = arith.addf %378, %386 : vector<2x256xf32>
    %388 = vector.extract_strided_slice %50 {offsets = [4, 0], sizes = [1, 256], strides = [1, 1]} : vector<7x256xf32> to vector<1x256xf32>
    %389 = vector.broadcast %388 : vector<1x256xf32> to vector<2x256xf32>
    %390 = arith.mulf %387, %389 : vector<2x256xf32>
    %391 = arith.addf %323, %390 : vector<2x256xf32>
    %cst_137 = arith.constant 0.000000e+00 : f32
    %392 = vector.broadcast %cst_137 : f32 to vector<2x256xf32>
    %393 = vector.extract_strided_slice %49 {offsets = [0, 5], sizes = [2, 256], strides = [1, 1]} : vector<2x358xf32> to vector<2x256xf32>
    %c0_138 = arith.constant 0 : index
    %c5 = arith.constant 5 : index
    %394 = memref.load %arg7[%c0_138, %c5] : memref<2x49xf32, #tpu.memory_space<smem>>
    %c1_139 = arith.constant 1 : index
    %c5_140 = arith.constant 5 : index
    %395 = memref.load %arg7[%c1_139, %c5_140] : memref<2x49xf32, #tpu.memory_space<smem>>
    %396 = vector.broadcast %394 : f32 to vector<2x1xf32>
    %397 = vector.broadcast %395 : f32 to vector<2x1xf32>
    %398 = arith.select %53, %396, %397 : vector<2x1xi1>, vector<2x1xf32>
    %399 = vector.broadcast %398 : vector<2x1xf32> to vector<2x256xf32>
    %400 = arith.mulf %393, %399 : vector<2x256xf32>
    %401 = arith.addf %392, %400 : vector<2x256xf32>
    %402 = vector.extract_strided_slice %49 {offsets = [0, 21], sizes = [2, 256], strides = [1, 1]} : vector<2x358xf32> to vector<2x256xf32>
    %c0_141 = arith.constant 0 : index
    %c12 = arith.constant 12 : index
    %403 = memref.load %arg7[%c0_141, %c12] : memref<2x49xf32, #tpu.memory_space<smem>>
    %c1_142 = arith.constant 1 : index
    %c12_143 = arith.constant 12 : index
    %404 = memref.load %arg7[%c1_142, %c12_143] : memref<2x49xf32, #tpu.memory_space<smem>>
    %405 = vector.broadcast %403 : f32 to vector<2x1xf32>
    %406 = vector.broadcast %404 : f32 to vector<2x1xf32>
    %407 = arith.select %53, %405, %406 : vector<2x1xi1>, vector<2x1xf32>
    %408 = vector.broadcast %407 : vector<2x1xf32> to vector<2x256xf32>
    %409 = arith.mulf %402, %408 : vector<2x256xf32>
    %410 = arith.addf %401, %409 : vector<2x256xf32>
    %411 = vector.extract_strided_slice %49 {offsets = [0, 37], sizes = [2, 256], strides = [1, 1]} : vector<2x358xf32> to vector<2x256xf32>
    %c0_144 = arith.constant 0 : index
    %c19 = arith.constant 19 : index
    %412 = memref.load %arg7[%c0_144, %c19] : memref<2x49xf32, #tpu.memory_space<smem>>
    %c1_145 = arith.constant 1 : index
    %c19_146 = arith.constant 19 : index
    %413 = memref.load %arg7[%c1_145, %c19_146] : memref<2x49xf32, #tpu.memory_space<smem>>
    %414 = vector.broadcast %412 : f32 to vector<2x1xf32>
    %415 = vector.broadcast %413 : f32 to vector<2x1xf32>
    %416 = arith.select %53, %414, %415 : vector<2x1xi1>, vector<2x1xf32>
    %417 = vector.broadcast %416 : vector<2x1xf32> to vector<2x256xf32>
    %418 = arith.mulf %411, %417 : vector<2x256xf32>
    %419 = arith.addf %410, %418 : vector<2x256xf32>
    %420 = vector.extract_strided_slice %49 {offsets = [0, 53], sizes = [2, 256], strides = [1, 1]} : vector<2x358xf32> to vector<2x256xf32>
    %c0_147 = arith.constant 0 : index
    %c26 = arith.constant 26 : index
    %421 = memref.load %arg7[%c0_147, %c26] : memref<2x49xf32, #tpu.memory_space<smem>>
    %c1_148 = arith.constant 1 : index
    %c26_149 = arith.constant 26 : index
    %422 = memref.load %arg7[%c1_148, %c26_149] : memref<2x49xf32, #tpu.memory_space<smem>>
    %423 = vector.broadcast %421 : f32 to vector<2x1xf32>
    %424 = vector.broadcast %422 : f32 to vector<2x1xf32>
    %425 = arith.select %53, %423, %424 : vector<2x1xi1>, vector<2x1xf32>
    %426 = vector.broadcast %425 : vector<2x1xf32> to vector<2x256xf32>
    %427 = arith.mulf %420, %426 : vector<2x256xf32>
    %428 = arith.addf %419, %427 : vector<2x256xf32>
    %429 = vector.extract_strided_slice %49 {offsets = [0, 69], sizes = [2, 256], strides = [1, 1]} : vector<2x358xf32> to vector<2x256xf32>
    %c0_150 = arith.constant 0 : index
    %c33 = arith.constant 33 : index
    %430 = memref.load %arg7[%c0_150, %c33] : memref<2x49xf32, #tpu.memory_space<smem>>
    %c1_151 = arith.constant 1 : index
    %c33_152 = arith.constant 33 : index
    %431 = memref.load %arg7[%c1_151, %c33_152] : memref<2x49xf32, #tpu.memory_space<smem>>
    %432 = vector.broadcast %430 : f32 to vector<2x1xf32>
    %433 = vector.broadcast %431 : f32 to vector<2x1xf32>
    %434 = arith.select %53, %432, %433 : vector<2x1xi1>, vector<2x1xf32>
    %435 = vector.broadcast %434 : vector<2x1xf32> to vector<2x256xf32>
    %436 = arith.mulf %429, %435 : vector<2x256xf32>
    %437 = arith.addf %428, %436 : vector<2x256xf32>
    %438 = vector.extract_strided_slice %49 {offsets = [0, 85], sizes = [2, 256], strides = [1, 1]} : vector<2x358xf32> to vector<2x256xf32>
    %c0_153 = arith.constant 0 : index
    %c40 = arith.constant 40 : index
    %439 = memref.load %arg7[%c0_153, %c40] : memref<2x49xf32, #tpu.memory_space<smem>>
    %c1_154 = arith.constant 1 : index
    %c40_155 = arith.constant 40 : index
    %440 = memref.load %arg7[%c1_154, %c40_155] : memref<2x49xf32, #tpu.memory_space<smem>>
    %441 = vector.broadcast %439 : f32 to vector<2x1xf32>
    %442 = vector.broadcast %440 : f32 to vector<2x1xf32>
    %443 = arith.select %53, %441, %442 : vector<2x1xi1>, vector<2x1xf32>
    %444 = vector.broadcast %443 : vector<2x1xf32> to vector<2x256xf32>
    %445 = arith.mulf %438, %444 : vector<2x256xf32>
    %446 = arith.addf %437, %445 : vector<2x256xf32>
    %447 = vector.extract_strided_slice %49 {offsets = [0, 101], sizes = [2, 256], strides = [1, 1]} : vector<2x358xf32> to vector<2x256xf32>
    %c0_156 = arith.constant 0 : index
    %c47 = arith.constant 47 : index
    %448 = memref.load %arg7[%c0_156, %c47] : memref<2x49xf32, #tpu.memory_space<smem>>
    %c1_157 = arith.constant 1 : index
    %c47_158 = arith.constant 47 : index
    %449 = memref.load %arg7[%c1_157, %c47_158] : memref<2x49xf32, #tpu.memory_space<smem>>
    %450 = vector.broadcast %448 : f32 to vector<2x1xf32>
    %451 = vector.broadcast %449 : f32 to vector<2x1xf32>
    %452 = arith.select %53, %450, %451 : vector<2x1xi1>, vector<2x1xf32>
    %453 = vector.broadcast %452 : vector<2x1xf32> to vector<2x256xf32>
    %454 = arith.mulf %447, %453 : vector<2x256xf32>
    %455 = arith.addf %446, %454 : vector<2x256xf32>
    %456 = vector.extract_strided_slice %50 {offsets = [5, 0], sizes = [1, 256], strides = [1, 1]} : vector<7x256xf32> to vector<1x256xf32>
    %457 = vector.broadcast %456 : vector<1x256xf32> to vector<2x256xf32>
    %458 = arith.mulf %455, %457 : vector<2x256xf32>
    %459 = arith.addf %391, %458 : vector<2x256xf32>
    %cst_159 = arith.constant 0.000000e+00 : f32
    %460 = vector.broadcast %cst_159 : f32 to vector<2x256xf32>
    %461 = vector.extract_strided_slice %49 {offsets = [0, 6], sizes = [2, 256], strides = [1, 1]} : vector<2x358xf32> to vector<2x256xf32>
    %c0_160 = arith.constant 0 : index
    %c6 = arith.constant 6 : index
    %462 = memref.load %arg7[%c0_160, %c6] : memref<2x49xf32, #tpu.memory_space<smem>>
    %c1_161 = arith.constant 1 : index
    %c6_162 = arith.constant 6 : index
    %463 = memref.load %arg7[%c1_161, %c6_162] : memref<2x49xf32, #tpu.memory_space<smem>>
    %464 = vector.broadcast %462 : f32 to vector<2x1xf32>
    %465 = vector.broadcast %463 : f32 to vector<2x1xf32>
    %466 = arith.select %53, %464, %465 : vector<2x1xi1>, vector<2x1xf32>
    %467 = vector.broadcast %466 : vector<2x1xf32> to vector<2x256xf32>
    %468 = arith.mulf %461, %467 : vector<2x256xf32>
    %469 = arith.addf %460, %468 : vector<2x256xf32>
    %470 = vector.extract_strided_slice %49 {offsets = [0, 22], sizes = [2, 256], strides = [1, 1]} : vector<2x358xf32> to vector<2x256xf32>
    %c0_163 = arith.constant 0 : index
    %c13 = arith.constant 13 : index
    %471 = memref.load %arg7[%c0_163, %c13] : memref<2x49xf32, #tpu.memory_space<smem>>
    %c1_164 = arith.constant 1 : index
    %c13_165 = arith.constant 13 : index
    %472 = memref.load %arg7[%c1_164, %c13_165] : memref<2x49xf32, #tpu.memory_space<smem>>
    %473 = vector.broadcast %471 : f32 to vector<2x1xf32>
    %474 = vector.broadcast %472 : f32 to vector<2x1xf32>
    %475 = arith.select %53, %473, %474 : vector<2x1xi1>, vector<2x1xf32>
    %476 = vector.broadcast %475 : vector<2x1xf32> to vector<2x256xf32>
    %477 = arith.mulf %470, %476 : vector<2x256xf32>
    %478 = arith.addf %469, %477 : vector<2x256xf32>
    %479 = vector.extract_strided_slice %49 {offsets = [0, 38], sizes = [2, 256], strides = [1, 1]} : vector<2x358xf32> to vector<2x256xf32>
    %c0_166 = arith.constant 0 : index
    %c20 = arith.constant 20 : index
    %480 = memref.load %arg7[%c0_166, %c20] : memref<2x49xf32, #tpu.memory_space<smem>>
    %c1_167 = arith.constant 1 : index
    %c20_168 = arith.constant 20 : index
    %481 = memref.load %arg7[%c1_167, %c20_168] : memref<2x49xf32, #tpu.memory_space<smem>>
    %482 = vector.broadcast %480 : f32 to vector<2x1xf32>
    %483 = vector.broadcast %481 : f32 to vector<2x1xf32>
    %484 = arith.select %53, %482, %483 : vector<2x1xi1>, vector<2x1xf32>
    %485 = vector.broadcast %484 : vector<2x1xf32> to vector<2x256xf32>
    %486 = arith.mulf %479, %485 : vector<2x256xf32>
    %487 = arith.addf %478, %486 : vector<2x256xf32>
    %488 = vector.extract_strided_slice %49 {offsets = [0, 54], sizes = [2, 256], strides = [1, 1]} : vector<2x358xf32> to vector<2x256xf32>
    %c0_169 = arith.constant 0 : index
    %c27 = arith.constant 27 : index
    %489 = memref.load %arg7[%c0_169, %c27] : memref<2x49xf32, #tpu.memory_space<smem>>
    %c1_170 = arith.constant 1 : index
    %c27_171 = arith.constant 27 : index
    %490 = memref.load %arg7[%c1_170, %c27_171] : memref<2x49xf32, #tpu.memory_space<smem>>
    %491 = vector.broadcast %489 : f32 to vector<2x1xf32>
    %492 = vector.broadcast %490 : f32 to vector<2x1xf32>
    %493 = arith.select %53, %491, %492 : vector<2x1xi1>, vector<2x1xf32>
    %494 = vector.broadcast %493 : vector<2x1xf32> to vector<2x256xf32>
    %495 = arith.mulf %488, %494 : vector<2x256xf32>
    %496 = arith.addf %487, %495 : vector<2x256xf32>
    %497 = vector.extract_strided_slice %49 {offsets = [0, 70], sizes = [2, 256], strides = [1, 1]} : vector<2x358xf32> to vector<2x256xf32>
    %c0_172 = arith.constant 0 : index
    %c34 = arith.constant 34 : index
    %498 = memref.load %arg7[%c0_172, %c34] : memref<2x49xf32, #tpu.memory_space<smem>>
    %c1_173 = arith.constant 1 : index
    %c34_174 = arith.constant 34 : index
    %499 = memref.load %arg7[%c1_173, %c34_174] : memref<2x49xf32, #tpu.memory_space<smem>>
    %500 = vector.broadcast %498 : f32 to vector<2x1xf32>
    %501 = vector.broadcast %499 : f32 to vector<2x1xf32>
    %502 = arith.select %53, %500, %501 : vector<2x1xi1>, vector<2x1xf32>
    %503 = vector.broadcast %502 : vector<2x1xf32> to vector<2x256xf32>
    %504 = arith.mulf %497, %503 : vector<2x256xf32>
    %505 = arith.addf %496, %504 : vector<2x256xf32>
    %506 = vector.extract_strided_slice %49 {offsets = [0, 86], sizes = [2, 256], strides = [1, 1]} : vector<2x358xf32> to vector<2x256xf32>
    %c0_175 = arith.constant 0 : index
    %c41 = arith.constant 41 : index
    %507 = memref.load %arg7[%c0_175, %c41] : memref<2x49xf32, #tpu.memory_space<smem>>
    %c1_176 = arith.constant 1 : index
    %c41_177 = arith.constant 41 : index
    %508 = memref.load %arg7[%c1_176, %c41_177] : memref<2x49xf32, #tpu.memory_space<smem>>
    %509 = vector.broadcast %507 : f32 to vector<2x1xf32>
    %510 = vector.broadcast %508 : f32 to vector<2x1xf32>
    %511 = arith.select %53, %509, %510 : vector<2x1xi1>, vector<2x1xf32>
    %512 = vector.broadcast %511 : vector<2x1xf32> to vector<2x256xf32>
    %513 = arith.mulf %506, %512 : vector<2x256xf32>
    %514 = arith.addf %505, %513 : vector<2x256xf32>
    %515 = vector.extract_strided_slice %49 {offsets = [0, 102], sizes = [2, 256], strides = [1, 1]} : vector<2x358xf32> to vector<2x256xf32>
    %c0_178 = arith.constant 0 : index
    %c48 = arith.constant 48 : index
    %516 = memref.load %arg7[%c0_178, %c48] : memref<2x49xf32, #tpu.memory_space<smem>>
    %c1_179 = arith.constant 1 : index
    %c48_180 = arith.constant 48 : index
    %517 = memref.load %arg7[%c1_179, %c48_180] : memref<2x49xf32, #tpu.memory_space<smem>>
    %518 = vector.broadcast %516 : f32 to vector<2x1xf32>
    %519 = vector.broadcast %517 : f32 to vector<2x1xf32>
    %520 = arith.select %53, %518, %519 : vector<2x1xi1>, vector<2x1xf32>
    %521 = vector.broadcast %520 : vector<2x1xf32> to vector<2x256xf32>
    %522 = arith.mulf %515, %521 : vector<2x256xf32>
    %523 = arith.addf %514, %522 : vector<2x256xf32>
    %524 = vector.extract_strided_slice %50 {offsets = [6, 0], sizes = [1, 256], strides = [1, 1]} : vector<7x256xf32> to vector<1x256xf32>
    %525 = vector.broadcast %524 : vector<1x256xf32> to vector<2x256xf32>
    %526 = arith.mulf %523, %525 : vector<2x256xf32>
    %527 = arith.addf %459, %526 : vector<2x256xf32>
    %528 = vector.extract_strided_slice %527 {offsets = [0, 0], sizes = [1, 256], strides = [1, 1]} : vector<2x256xf32> to vector<1x256xf32>
    %529 = vector.extract_strided_slice %527 {offsets = [1, 0], sizes = [1, 256], strides = [1, 1]} : vector<2x256xf32> to vector<1x256xf32>
    %530 = arith.addf %528, %529 : vector<1x256xf32>
    %531 = arith.negf %530 : vector<1x256xf32>
    %532 = math.exp %531 : vector<1x256xf32>
    %cst_181 = arith.constant 1.000000e+00 : f32
    %533 = vector.broadcast %cst_181 : f32 to vector<1x256xf32>
    %534 = arith.addf %533, %532 : vector<1x256xf32>
    %535 = arith.divf %533, %534 : vector<1x256xf32>
    %536 = vector.broadcast %535 : vector<1x256xf32> to vector<8x256xf32>
    %537 = arith.mulf %536, %40 : vector<8x256xf32>
    %538 = arith.addf %537, %5 : vector<8x256xf32>
    %c0_182 = arith.constant 0 : index
    %c0_183 = arith.constant 0 : index
    %c0_184 = arith.constant 0 : index
    %539 = vector.load %arg8[%c0_182, %c0_183, %c0_184] : memref<1x8x256xf32, #tpu.memory_space<vmem>>, vector<1x8x256xf32>
    %540 = vector.shape_cast %539 : vector<1x8x256xf32> to vector<8x256xf32>
    %541 = vector.shape_cast %538 : vector<8x256xf32> to vector<1x8x256xf32>
    tpu.vector_store %arg8[%c0_182, %c0_183, %c0_184], %541 {strides = array<i32>} : memref<1x8x256xf32, #tpu.memory_space<vmem>>, vector<1x8x256xf32>,
    return
  }
  func.func @transform_0(%arg0: i32) -> (i32, i32, i32) {
    %c0_i32 = arith.constant 0 : i32
    %c0_i32_0 = arith.constant 0 : i32
    %c0_i32_1 = arith.constant 0 : i32
    return %arg0, %c0_i32, %c0_i32_0 : i32, i32, i32
  }
  func.func @transform_1(%arg0: i32) -> (i32, i32) {
    %c0_i32 = arith.constant 0 : i32
    %c0_i32_0 = arith.constant 0 : i32
    %c0_i32_1 = arith.constant 0 : i32
    return %c0_i32, %c0_i32_0 : i32, i32
  }
  func.func @transform_2(%arg0: i32) -> (i32, i32) {
    %c0_i32 = arith.constant 0 : i32
    %c0_i32_0 = arith.constant 0 : i32
    %c0_i32_1 = arith.constant 0 : i32
    return %c0_i32, %c0_i32_0 : i32, i32
  }
  func.func @transform_3(%arg0: i32) -> (i32, i32) {
    %c0_i32 = arith.constant 0 : i32
    %c0_i32_0 = arith.constant 0 : i32
    %c0_i32_1 = arith.constant 0 : i32
    return %c0_i32, %c0_i32_0 : i32, i32
  }
  func.func @transform_4(%arg0: i32) -> (i32, i32) {
    %c0_i32 = arith.constant 0 : i32
    %c0_i32_0 = arith.constant 0 : i32
    %c0_i32_1 = arith.constant 0 : i32
    return %c0_i32, %c0_i32_0 : i32, i32
  }
  func.func @transform_5(%arg0: i32) -> (i32, i32) {
    %c0_i32 = arith.constant 0 : i32
    %c0_i32_0 = arith.constant 0 : i32
    %c0_i32_1 = arith.constant 0 : i32
    return %c0_i32, %c0_i32_0 : i32, i32
  }
  func.func @transform_6(%arg0: i32) -> (i32, i32) {
    %c0_i32 = arith.constant 0 : i32
    %c0_i32_0 = arith.constant 0 : i32
    %c0_i32_1 = arith.constant 0 : i32
    return %c0_i32, %c0_i32_0 : i32, i32
  }
  func.func @transform_7(%arg0: i32) -> (i32, i32, i32) {
    %c0_i32 = arith.constant 0 : i32
    %c0_i32_0 = arith.constant 0 : i32
    %c0_i32_1 = arith.constant 0 : i32
    return %arg0, %c0_i32, %c0_i32_0 : i32, i32, i32
  }
}

</mosaic_0001>

<llo_original>
// kernel: tpu_custom_call.1
$region0: #{tpu_custom_call.1}
  #allocation0 [shape = 'u32[]', space=smem, size = 0x4, offset = 0x4, fixed_abs, tag = 'smem constant byte address 0x4 - core index']
  #allocation1 [shape = 'u32[144,128]{1,0:T(1,128)}', space=vmem, size = 0x12000, scoped, tag = 'internal scratch']
  %s0 = inlined_call_operand.vmem [shape: f32[2,8,256], index: 0, kind: input, shape index: {}]
  %s1 = inlined_call_operand.vmem [shape: f32[8,4], index: 1, kind: input, shape index: {}]
  %s2 = inlined_call_operand.hbm [shape: f32[1,4], index: 2, kind: input, shape index: {}]
  %s3 = inlined_call_operand.vmem [shape: f32[8,4], index: 3, kind: input, shape index: {}]
  %s4 = inlined_call_operand.vmem [shape: f32[8,1], index: 4, kind: input, shape index: {}]
  %s5 = inlined_call_operand.vmem [shape: f32[7,256], index: 5, kind: input, shape index: {}]
  %s6 = inlined_call_operand.vmem [shape: f32[2,49], index: 6, kind: input, shape index: {}]
  %s7 = inlined_call_operand.hbm [shape: f32[2,8,256], index: 7, kind: output, shape index: {}]
  %s8 = sld [smem:[#allocation0]]
  $region69: #{tpu_custom_call.1} parent=0
    _
  %s10 = ssub.s32 1, %s8
  %s11 = scalar_select 0, %s10, %s8
  $region1: #{tpu_custom_call.1} parent=0
    #allocation2 [shape = 'u8[512]{0}', space=vmem, size = 0x400, scoped, tag = 'input window, operand 2, single buffered']
    #allocation3 [shape = 's32[2]{0}', space=sflag, size = 0x8, scoped, tag = 'scoped memory for tpu_custom_call.1']
    #allocation4 [shape = 's32[2]{0}', space=sflag, size = 0x8, scoped, tag = 'scoped memory for tpu_custom_call.1']
    #allocation5 [shape = 's32[2]{0}', space=sflag, size = 0x8, scoped, tag = 'scoped memory for tpu_custom_call.1']
    #allocation6 [shape = 'u8[1024]{0}', space=smem, size = 0x400, scoped, tag = 'input window, operand 6, single buffered']
    #allocation7 [shape = 'u8[16384]{0}', space=vmem, size = 0x4000, scoped, tag = 'output window, operand 0']
    %12 = vsyncpa [#allocation3], 0
    %13 = vsyncpa [#allocation5], 0
    %14 = vsyncpa [#allocation4], 0
    %s15 = scalar_lea.sflag [#allocation4], 1
    %16 = vsyncpa %s15, 0
    loop: start=0, step=1, limit=4
    $region2: #{tpu_custom_call.1} parent=1 // loop_pre_header
      _
    $region3: #{tpu_custom_call.1} parent=1 // loop_header
      %s18 = sphi 0, %s22
      %p19 = scmp.ge.s32.totalorder %s18, 4
      %s28 = sphi 0, %s30
      %s31 = sphi 0, %s28
      %s32 = sphi 0, %s31
      %s48 = sphi 0, %s32
      %s52 = sphi 0, %s52
      %s54 = sphi 0, %s52
      %s55 = sphi 0, %s54
      %s69 = sphi 0, %s55
      %s73 = sphi 0, %s73
      %s75 = sphi 0, %s73
      %s76 = sphi 0, %s75
      %s90 = sphi 0, %s76
      %s94 = sphi 0, %s94
      %s96 = sphi 0, %s94
      %s97 = sphi 0, %s96
      %s111 = sphi 0, %s97
      %s115 = sphi 0, %s115
      %s117 = sphi 0, %s115
      %s118 = sphi 0, %s117
      %s132 = sphi 0, %s118
      %s136 = sphi 0, %s136
      %s138 = sphi 0, %s136
      %s139 = sphi 0, %s138
      %s153 = sphi 0, %s139
      %s157 = sphi 0, %s157
      %s159 = sphi 0, %s157
      %s160 = sphi 0, %s159
      %s174 = sphi 0, %s160
      %s180 = sphi 0, %s182
      %s183 = sphi 0, %s180
      %s184 = sphi 0, %s183
      %s200 = sphi 0, %s184
    $region4: #{tpu_custom_call.1} parent=1 // loop_header_branch
      %21 = sbr.rel (%p19) target = $region8
    $region5: #{tpu_custom_call.1} parent=1 // loop_body
      %s23 = ssub.s32 %s18, 1
      %s24 = ssub.s32 %s18, 2
      %s25 = sadd.s32 %s18, 1
      %s26 = ssub.s32 %s18, %s25
      %p27 = scmp.eq.s32.totalorder %s26, 0
      %s29 = sadd.s32 %s28, 1
      %s30 = scalar_select %p27, %s28, %s29
      %p33 = pneg %p27
      %p34 = scmp.eq.s32.totalorder %s18, 1
      %p35 = por %p33, %p34
      %p36 = scmp.ne.s32.totalorder %s28, %s31
      %p37 = scmp.eq.s32.totalorder %s18, 0
      %p38 = por %p36, %p37
      %p39 = scmp.ne.s32.totalorder %s28, %s31
      %p40 = scmp.eq.s32.totalorder %s23, 1
      %p41 = por %p39, %p40
      %p42 = scmp.ne.s32.totalorder %s31, %s32
      %p43 = scmp.eq.s32.totalorder %s23, 0
      %p44 = por %p42, %p43
      %p45 = scmp.ne.s32.totalorder %s31, %s32
      %p46 = scmp.eq.s32.totalorder %s24, 1
      %p47 = por %p45, %p46
      %p49 = scmp.ne.s32.totalorder %s32, %s48
      %p50 = scmp.eq.s32.totalorder %s24, 0
      %p51 = por %p49, %p50
      %s53 = sadd.s32 %s52, 1
      %p56 = scmp.eq.s32.totalorder %s18, 1
      %p57 = scmp.ne.s32.totalorder %s52, %s54
      %p58 = scmp.eq.s32.totalorder %s18, 0
      %p59 = por %p57, %p58
      %p60 = scmp.ne.s32.totalorder %s52, %s54
      %p61 = scmp.eq.s32.totalorder %s23, 1
      %p62 = por %p60, %p61
      %p63 = scmp.ne.s32.totalorder %s54, %s55
      %p64 = scmp.eq.s32.totalorder %s23, 0
      %p65 = por %p63, %p64
      %p66 = scmp.ne.s32.totalorder %s54, %s55
      %p67 = scmp.eq.s32.totalorder %s24, 1
      %p68 = por %p66, %p67
      %p70 = scmp.ne.s32.totalorder %s55, %s69
      %p71 = scmp.eq.s32.totalorder %s24, 0
      %p72 = por %p70, %p71
      %s74 = sadd.s32 %s73, 1
      %p77 = scmp.eq.s32.totalorder %s18, 1
      %p78 = scmp.ne.s32.totalorder %s73, %s75
      %p79 = scmp.eq.s32.totalorder %s18, 0
      %p80 = por %p78, %p79
      %p81 = scmp.ne.s32.totalorder %s73, %s75
      %p82 = scmp.eq.s32.totalorder %s23, 1
      %p83 = por %p81, %p82
      %p84 = scmp.ne.s32.totalorder %s75, %s76
      %p85 = scmp.eq.s32.totalorder %s23, 0
      %p86 = por %p84, %p85
      %p87 = scmp.ne.s32.totalorder %s75, %s76
      %p88 = scmp.eq.s32.totalorder %s24, 1
      %p89 = por %p87, %p88
      %p91 = scmp.ne.s32.totalorder %s76, %s90
      %p92 = scmp.eq.s32.totalorder %s24, 0
      %p93 = por %p91, %p92
      %s95 = sadd.s32 %s94, 1
      %p98 = scmp.eq.s32.totalorder %s18, 1
      %p99 = scmp.ne.s32.totalorder %s94, %s96
      %p100 = scmp.eq.s32.totalorder %s18, 0
      %p101 = por %p99, %p100
      %p102 = scmp.ne.s32.totalorder %s94, %s96
      %p103 = scmp.eq.s32.totalorder %s23, 1
      %p104 = por %p102, %p103
      %p105 = scmp.ne.s32.totalorder %s96, %s97
      %p106 = scmp.eq.s32.totalorder %s23, 0
      %p107 = por %p105, %p106
      %p108 = scmp.ne.s32.totalorder %s96, %s97
      %p109 = scmp.eq.s32.totalorder %s24, 1
      %p110 = por %p108, %p109
      %p112 = scmp.ne.s32.totalorder %s97, %s111
      %p113 = scmp.eq.s32.totalorder %s24, 0
      %p114 = por %p112, %p113
      %s116 = sadd.s32 %s115, 1
      %p119 = scmp.eq.s32.totalorder %s18, 1
      %p120 = scmp.ne.s32.totalorder %s115, %s117
      %p121 = scmp.eq.s32.totalorder %s18, 0
      %p122 = por %p120, %p121
      %p123 = scmp.ne.s32.totalorder %s115, %s117
      %p124 = scmp.eq.s32.totalorder %s23, 1
      %p125 = por %p123, %p124
      %p126 = scmp.ne.s32.totalorder %s117, %s118
      %p127 = scmp.eq.s32.totalorder %s23, 0
      %p128 = por %p126, %p127
      %p129 = scmp.ne.s32.totalorder %s117, %s118
      %p130 = scmp.eq.s32.totalorder %s24, 1
      %p131 = por %p129, %p130
      %p133 = scmp.ne.s32.totalorder %s118, %s132
      %p134 = scmp.eq.s32.totalorder %s24, 0
      %p135 = por %p133, %p134
      %s137 = sadd.s32 %s136, 1
      %p140 = scmp.eq.s32.totalorder %s18, 1
      %p141 = scmp.ne.s32.totalorder %s136, %s138
      %p142 = scmp.eq.s32.totalorder %s18, 0
      %p143 = por %p141, %p142
      %p144 = scmp.ne.s32.totalorder %s136, %s138
      %p145 = scmp.eq.s32.totalorder %s23, 1
      %p146 = por %p144, %p145
      %p147 = scmp.ne.s32.totalorder %s138, %s139
      %p148 = scmp.eq.s32.totalorder %s23, 0
      %p149 = por %p147, %p148
      %p150 = scmp.ne.s32.totalorder %s138, %s139
      %p151 = scmp.eq.s32.totalorder %s24, 1
      %p152 = por %p150, %p151
      %p154 = scmp.ne.s32.totalorder %s139, %s153
      %p155 = scmp.eq.s32.totalorder %s24, 0
      %p156 = por %p154, %p155
      %s158 = sadd.s32 %s157, 1
      %p161 = scmp.eq.s32.totalorder %s18, 1
      %p162 = scmp.ne.s32.totalorder %s157, %s159
      %p163 = scmp.eq.s32.totalorder %s18, 0
      %p164 = por %p162, %p163
      %p165 = scmp.ne.s32.totalorder %s157, %s159
      %p166 = scmp.eq.s32.totalorder %s23, 1
      %p167 = por %p165, %p166
      %p168 = scmp.ne.s32.totalorder %s159, %s160
      %p169 = scmp.eq.s32.totalorder %s23, 0
      %p170 = por %p168, %p169
      %p171 = scmp.ne.s32.totalorder %s159, %s160
      %p172 = scmp.eq.s32.totalorder %s24, 1
      %p173 = por %p171, %p172
      %p175 = scmp.ne.s32.totalorder %s160, %s174
      %p176 = scmp.eq.s32.totalorder %s24, 0
      %p177 = por %p175, %p176
      %s178 = ssub.s32 %s18, %s25
      %p179 = scmp.eq.s32.totalorder %s178, 0
      %s181 = sadd.s32 %s180, 1
      %s182 = scalar_select %p179, %s180, %s181
      %p185 = pneg %p179
      %p186 = scmp.eq.s32.totalorder %s18, 1
      %p187 = por %p185, %p186
      %p188 = scmp.ne.s32.totalorder %s180, %s183
      %p189 = scmp.eq.s32.totalorder %s18, 0
      %p190 = por %p188, %p189
      %p191 = scmp.ne.s32.totalorder %s180, %s183
      %p192 = scmp.eq.s32.totalorder %s23, 1
      %p193 = por %p191, %p192
      %p194 = scmp.ne.s32.totalorder %s183, %s184
      %p195 = scmp.eq.s32.totalorder %s23, 0
      %p196 = por %p194, %p195
      %p197 = scmp.ne.s32.totalorder %s183, %s184
      %p198 = scmp.eq.s32.totalorder %s24, 1
      %p199 = por %p197, %p198
      %p201 = scmp.ne.s32.totalorder %s184, %s200
      %p202 = scmp.eq.s32.totalorder %s24, 0
      %p203 = por %p201, %p202
      %p204 = scmp.le.s32.totalorder 1, %s18
      %p205 = scmp.lt.s32.totalorder %s18, 3
      %p206 = pnand %p204, %p205
      %p207 = pneg %p206
      // Predicated region
      $region9: #{tpu_custom_call.1} parent=5 // pred_check
        _
      $region10: #{tpu_custom_call.1} parent=5 // pred_check_branch
        %209 = sbr.rel (%p206) target = $region12
      $region11: #{tpu_custom_call.1} parent=5 // pred_region
        %s210 = ssub.s32 %s18, 1
        // Predicated region
        $region13: #{tpu_custom_call.1} parent=11 // pred_check
          %p211 = pneg %p65
        $region14: #{tpu_custom_call.1} parent=11 // pred_check_branch
          %213 = sbr.rel (%p211) target = $region16
        $region15: #{tpu_custom_call.1} parent=11 // pred_region
          _
        $region16: #{tpu_custom_call.1} parent=11 // pred_fallthru
          _
        // Predicated region
        $region17: #{tpu_custom_call.1} parent=11 // pred_check
          %p214 = pneg %p86
        $region18: #{tpu_custom_call.1} parent=11 // pred_check_branch
          %216 = sbr.rel (%p214) target = $region20
        $region19: #{tpu_custom_call.1} parent=11 // pred_region
          %s218 = ssub.s32 16, 16
          %219 = vsyncadd [#allocation3], %s218
          %s221 = sshll.u32 [#allocation2], 4
          %s222 = int_to_ptr.vmem [resolvable:$true] %s221
          %224 = dma.hbm_to_vmem [thread:$0]  %s2, 16, %s222, [#allocation3]
        $region20: #{tpu_custom_call.1} parent=11 // pred_fallthru
          _
        // Predicated region
        $region21: #{tpu_custom_call.1} parent=11 // pred_check
          %p225 = pneg %p107
        $region22: #{tpu_custom_call.1} parent=11 // pred_check_branch
          %227 = sbr.rel (%p225) target = $region24
        $region23: #{tpu_custom_call.1} parent=11 // pred_region
          _
        $region24: #{tpu_custom_call.1} parent=11 // pred_fallthru
          _
        // Predicated region
        $region25: #{tpu_custom_call.1} parent=11 // pred_check
          %p228 = pneg %p128
        $region26: #{tpu_custom_call.1} parent=11 // pred_check_branch
          %230 = sbr.rel (%p228) target = $region28
        $region27: #{tpu_custom_call.1} parent=11 // pred_region
          _
        $region28: #{tpu_custom_call.1} parent=11 // pred_fallthru
          _
        // Predicated region
        $region29: #{tpu_custom_call.1} parent=11 // pred_check
          %p231 = pneg %p149
        $region30: #{tpu_custom_call.1} parent=11 // pred_check_branch
          %233 = sbr.rel (%p231) target = $region32
        $region31: #{tpu_custom_call.1} parent=11 // pred_region
          _
        $region32: #{tpu_custom_call.1} parent=11 // pred_fallthru
          _
        // Predicated region
        $region33: #{tpu_custom_call.1} parent=11 // pred_check
          %p234 = pneg %p170
        $region34: #{tpu_custom_call.1} parent=11 // pred_check_branch
          %236 = sbr.rel (%p234) target = $region36
        $region35: #{tpu_custom_call.1} parent=11 // pred_region
          %s238 = ssub.s32 32, 32
          %239 = vsyncadd [#allocation5], %s238
          %s241 = sshll.u32 %s6, 4
          %s242 = int_to_ptr.vmem [resolvable:$true] %s241
          %244 = dma.vmem_to_smem %s242, 32, [#allocation6], [#allocation5]
        $region36: #{tpu_custom_call.1} parent=11 // pred_fallthru
          _
      $region12: #{tpu_custom_call.1} parent=5 // pred_fallthru
        _
      %p245 = scmp.lt.s32.totalorder %s18, 2
      // Predicated region
      $region37: #{tpu_custom_call.1} parent=5 // pred_check
        %p246 = pneg %p245
      $region38: #{tpu_custom_call.1} parent=5 // pred_check_branch
        %248 = sbr.rel (%p246) target = $region40
      $region39: #{tpu_custom_call.1} parent=5 // pred_region
        // Predicated region
        $region41: #{tpu_custom_call.1} parent=39 // pred_check
          %p249 = pneg %p38
        $region42: #{tpu_custom_call.1} parent=39 // pred_check_branch
          %251 = sbr.rel (%p249) target = $region44
        $region43: #{tpu_custom_call.1} parent=39 // pred_region
          %p252 = scmp.lt.s32.totalorder %s18, 1
          %s253 = scalar_select %p252, %s18, 1
          %s254 = smul.addr %s253, 2
          %s255 = smul.addr %s254, 8
          %s256 = scalar_lea.vmem %s0, %s255
        $region44: #{tpu_custom_call.1} parent=39 // pred_fallthru
          _
      $region40: #{tpu_custom_call.1} parent=5 // pred_fallthru
        _
      %p257 = scmp.le.s32.totalorder 1, %s18
      %p258 = scmp.lt.s32.totalorder %s18, 3
      %p259 = pnand %p257, %p258
      %p260 = pneg %p259
      // Predicated region
      $region45: #{tpu_custom_call.1} parent=5 // pred_check
        _
      $region46: #{tpu_custom_call.1} parent=5 // pred_check_branch
        %262 = sbr.rel (%p259) target = $region48
      $region47: #{tpu_custom_call.1} parent=5 // pred_region
        %s263 = ssub.s32 %s18, 1
        // Predicated region
        $region49: #{tpu_custom_call.1} parent=47 // pred_check
          %p264 = pneg %p86
        $region50: #{tpu_custom_call.1} parent=47 // pred_check_branch
          %266 = sbr.rel (%p264) target = $region52
        $region51: #{tpu_custom_call.1} parent=47 // pred_region
          %267 = dma.done [#allocation3], 16
        $region52: #{tpu_custom_call.1} parent=47 // pred_fallthru
          _
        // Predicated region
        $region53: #{tpu_custom_call.1} parent=47 // pred_check
          %p268 = pneg %p170
        $region54: #{tpu_custom_call.1} parent=47 // pred_check_branch
          %270 = sbr.rel (%p268) target = $region56
        $region55: #{tpu_custom_call.1} parent=47 // pred_region
          %271 = dma.done [#allocation5], 32
        $region56: #{tpu_custom_call.1} parent=47 // pred_fallthru
          _
        %272 = sfence
        %p273 = scmp.lt.s32.totalorder %s23, 1
        %s274 = scalar_select %p273, %s23, 1
        %s275 = smul.addr %s274, 2
        %s276 = smul.addr %s275, 8
        %s277 = scalar_lea.vmem %s0, %s276
        %p278 = pneg %p44
        %p279 = pneg %p41
        %p280 = pneg %p65
        %p281 = pneg %p62
        %p282 = pneg %p86
        %p283 = pneg %p83
        %p284 = pneg %p107
        %p285 = pneg %p104
        %p286 = pneg %p128
        %p287 = pneg %p125
        %p288 = pneg %p149
        %p289 = pneg %p146
        %p290 = pneg %p170
        %p291 = pneg %p167
        %p292 = pneg %p196
        %p293 = pneg %p193
        %s294 = sand.u32 %s183, 1
        %s295 = scalar_lea.sflag [#allocation4], %s294
        %s296 = sand.u32 %s183, 1
        %s297 = smul.addr %s296, 16
        %s298 = scalar_lea.vmem [#allocation7], %s297
        %p299 = scmp.lt.s32.totalorder %s23, 1
        %s300 = scalar_select %p299, %s23, 1
        %s301 = smul.addr %s300, 2
        %s302 = smul.addr %s301, 8
        %s303 = scalar_lea.vmem %s0, %s302
        %v304 = vld [vmem:[%s1] sm:$0xff]
        %v305 = vld [vmem:[#allocation2] sm:$0x1]
        %v306 = vld [vmem:[%s3] sm:$0xff]
        %v307 = vld [vmem:[%s4] sm:$0xff]
        %v308 = vld [vmem:[%s303] sm:$0xff]
        %v309 = vld [vmem:[%s303 + $0x8] sm:$0xff]
        %v310 = vmax.f32 %v308, %v309
        %311 = vmax.xlane.f32.xlu0 %v310
        %v312 = vpop.xlane.xlu0 %311
        %v313 = vadd.f32 %v308, %v309
        %314 = vadd.xlane.f32.xlu0 %v313
        %v315 = vpop.xlane.xlu0 %314
        %v316 = vmul.f32 %v315, 0.00390625
        %v317 = vmul.f32 %v312, %v304
        %vm318 = vcmask 31744
        %v319 = vsel %vm318, %v317, 0.0
        %v320 = vrot.slane %v319, 4
        %v321 = vadd.f32 %v319, %v320
        %v322 = vrot.slane %v321, 2
        %v323 = vadd.f32 %v321, %v322
        %v324 = vrot.slane %v323, 1
        %v325 = vadd.f32 %v323, %v324
        %v326 = vadd.f32 %v325, %v305
        %v327 = vmax.f32 %v326, 0.0
        %v328 = vmul.f32 %v316, %v304
        %v329 = vsel %vm318, %v328, 0.0
        %v330 = vrot.slane %v329, 4
        %v331 = vadd.f32 %v329, %v330
        %v332 = vrot.slane %v331, 2
        %v333 = vadd.f32 %v331, %v332
        %v334 = vrot.slane %v333, 1
        %v335 = vadd.f32 %v333, %v334
        %v336 = vadd.f32 %v335, %v305
        %v337 = vmax.f32 %v336, 0.0
        %v338 = vadd.f32 %v327, %v337
        %v339 = vlaneseq
        %v340 = vshrl.u32 %v339, 7
        %v341 = vsub.s32 0, %v340
        %v342 = vrot.slane %v338, %v341
        %v343 = vmul.f32 %v306, %v342
        %v344 = vsel %vm318, %v343, 0.0
        %345 = vadd.xlane.f32.xlu0 %v344
        %v346 = vpop.xlane.xlu0 %345
        %v347 = vmul.f32 %v307, 2.0
        %v348 = vadd.f32 %v346, %v347
        %v349 = vxor.u32 %v348, 2147483648
        %v350 = vmul.f32 %v349, 1.442695
        %v351 = vpow.pop %v350
        %v352 = vadd.f32 %v351, 1.0
        %v353 = vrcp.pop %v352
        %v354 = vmul.f32 1.0, %v353
        %356 = vset.pattern.permute.xlu0 0
        %357 = vperm.xlu0 %356, %v354
        %v358 = vpop.permute.xlu0 %357
        %v360 = vmul.f32 %v358, %v308
        %v361 = vmul.f32 %v358, %v309
        %v362 = vrot.slane %v360, 4
        %v363 = vmax.f32 %v360, %v362
        %v364 = vrot.slane %v363, 2
        %v365 = vmax.f32 %v363, %v364
        %v366 = vrot.slane %v365, 1
        %v367 = vmax.f32 %v365, %v366
        %v368 = vrot.slane %v361, 4
        %v369 = vmax.f32 %v361, %v368
        %v370 = vrot.slane %v369, 2
        %v371 = vmax.f32 %v369, %v370
        %v372 = vrot.slane %v371, 1
        %v373 = vmax.f32 %v371, %v372
        %v374 = vrot.slane %v360, 4
        %v375 = vadd.f32 %v360, %v374
        %v376 = vrot.slane %v375, 2
        %v377 = vadd.f32 %v375, %v376
        %v378 = vrot.slane %v377, 1
        %v379 = vadd.f32 %v377, %v378
        %v380 = vrot.slane %v361, 4
        %v381 = vadd.f32 %v361, %v380
        %v382 = vrot.slane %v381, 2
        %v383 = vadd.f32 %v381, %v382
        %v384 = vrot.slane %v383, 1
        %v385 = vadd.f32 %v383, %v384
        %v386 = vmul.f32 %v379, 0.125
        %v387 = vmul.f32 %v385, 0.125
        %vm388 = vcmask 1040384
        %v389 = vsel %vm388, %v367, %v386
        %v390 = vsel %vm388, %v373, %v387
        %393 = vrot.lane.b32.xlu0 %v389, 51
        %v394 = vpop.permute.xlu0 %393
        %395 = vrot.lane.b32.xlu0 %v390, 51
        %v396 = vpop.permute.xlu0 %395
        %vm397 = vcmask 416768
        %v398 = vsel %vm397, %v394, %v396
        %v402 = vsel %vm397, 0.0, %v394
        %v403 = vsel %vm397, %v396, 0.0
        %v404 = vld [vmem:[%s5] sm:$0x7f]
        %v405 = vld [vmem:[%s5 + $0x8] sm:$0x7f]
        %v406 = vlaneseq
        %v407 = vshrl.u32 %v406, 7
        %vm408 = vcmp.lt.s32.totalorder %v407, 1
        %s409 = sld [smem:[#allocation6]]
        %s410 = sld [smem:[#allocation6 + $0x80]]
        %v411 = vstv %s409
        %v412 = vstv %s410
        %v413 = vsel %vm408, %v411, %v412
        %v414 = vmul.f32 %v402, %v413
        %v415 = vmul.f32 %v398, %v413
        %v416 = vadd.f32 %v414, 0.0
        %v417 = vadd.f32 %v415, 0.0
        %s418 = sld [smem:[#allocation6 + $0x7]]
        %s419 = sld [smem:[#allocation6 + $0x87]]
        %v420 = vstv %s418
        %v421 = vstv %s419
        %v422 = vsel %vm408, %v420, %v421
        %v423 = vmul.f32 %v402, %v422
        %v424 = vmul.f32 %v398, %v422
        %v425 = vmul.f32 %v403, %v422
        %429 = vrot.lane.b32.xlu0 %v423, 112
        %v430 = vpop.permute.xlu0 %429
        %431 = vrot.lane.b32.xlu0 %v424, 112
        %v432 = vpop.permute.xlu0 %431
        %433 = vrot.lane.b32.xlu0 %v425, 112
        %v434 = vpop.permute.xlu0 %433
        %vm435 = vcmask 916480
        %v436 = vsel %vm435, %v430, %v432
        %v437 = vsel %vm435, %v432, %v434
        %v440 = vadd.f32 %v416, %v436
        %v441 = vadd.f32 %v417, %v437
        %s442 = sld [smem:[#allocation6 + $0xe]]
        %s443 = sld [smem:[#allocation6 + $0x8e]]
        %v444 = vstv %s442
        %v445 = vstv %s443
        %v446 = vsel %vm408, %v444, %v445
        %v447 = vmul.f32 %v402, %v446
        %v448 = vmul.f32 %v398, %v446
        %v449 = vmul.f32 %v403, %v446
        %453 = vrot.lane.b32.xlu0 %v447, 96
        %v454 = vpop.permute.xlu0 %453
        %455 = vrot.lane.b32.xlu0 %v448, 96
        %v456 = vpop.permute.xlu0 %455
        %457 = vrot.lane.b32.xlu0 %v449, 96
        %v458 = vpop.permute.xlu0 %457
        %vm459 = vcmask 785408
        %v460 = vsel %vm459, %v454, %v456
        %v461 = vsel %vm459, %v456, %v458
        %v464 = vadd.f32 %v440, %v460
        %v465 = vadd.f32 %v441, %v461
        %s466 = sld [smem:[#allocation6 + $0x15]]
        %s467 = sld [smem:[#allocation6 + $0x95]]
        %v468 = vstv %s466
        %v469 = vstv %s467
        %v470 = vsel %vm408, %v468, %v469
        %v471 = vmul.f32 %v402, %v470
        %v472 = vmul.f32 %v398, %v470
        %v473 = vmul.f32 %v403, %v470
        %477 = vrot.lane.b32.xlu0 %v471, 80
        %v478 = vpop.permute.xlu0 %477
        %479 = vrot.lane.b32.xlu0 %v472, 80
        %v480 = vpop.permute.xlu0 %479
        %481 = vrot.lane.b32.xlu0 %v473, 80
        %v482 = vpop.permute.xlu0 %481
        %vm483 = vcmask 654336
        %v484 = vsel %vm483, %v478, %v480
        %v485 = vsel %vm483, %v480, %v482
        %v488 = vadd.f32 %v464, %v484
        %v489 = vadd.f32 %v465, %v485
        %s490 = sld [smem:[#allocation6 + $0x1c]]
        %s491 = sld [smem:[#allocation6 + $0x9c]]
        %v492 = vstv %s490
        %v493 = vstv %s491
        %v494 = vsel %vm408, %v492, %v493
        %v495 = vmul.f32 %v402, %v494
        %v496 = vmul.f32 %v398, %v494
        %v497 = vmul.f32 %v403, %v494
        %501 = vrot.lane.b32.xlu0 %v495, 64
        %v502 = vpop.permute.xlu0 %501
        %503 = vrot.lane.b32.xlu0 %v496, 64
        %v504 = vpop.permute.xlu0 %503
        %505 = vrot.lane.b32.xlu0 %v497, 64
        %v506 = vpop.permute.xlu0 %505
        %vm507 = vcmask 523264
        %v508 = vsel %vm507, %v502, %v504
        %v509 = vsel %vm507, %v504, %v506
        %v512 = vadd.f32 %v488, %v508
        %v513 = vadd.f32 %v489, %v509
        %s514 = sld [smem:[#allocation6 + $0x23]]
        %s515 = sld [smem:[#allocation6 + $0xa3]]
        %v516 = vstv %s514
        %v517 = vstv %s515
        %v518 = vsel %vm408, %v516, %v517
        %v519 = vmul.f32 %v402, %v518
        %v520 = vmul.f32 %v398, %v518
        %v521 = vmul.f32 %v403, %v518
        %525 = vrot.lane.b32.xlu0 %v519, 48
        %v526 = vpop.permute.xlu0 %525
        %527 = vrot.lane.b32.xlu0 %v520, 48
        %v528 = vpop.permute.xlu0 %527
        %529 = vrot.lane.b32.xlu0 %v521, 48
        %v530 = vpop.permute.xlu0 %529
        %vm531 = vcmask 392192
        %v532 = vsel %vm531, %v526, %v528
        %v533 = vsel %vm531, %v528, %v530
        %v536 = vadd.f32 %v512, %v532
        %v537 = vadd.f32 %v513, %v533
        %s538 = sld [smem:[#allocation6 + $0x2a]]
        %s539 = sld [smem:[#allocation6 + $0xaa]]
        %v540 = vstv %s538
        %v541 = vstv %s539
        %v542 = vsel %vm408, %v540, %v541
        %v543 = vmul.f32 %v402, %v542
        %v544 = vmul.f32 %v398, %v542
        %v545 = vmul.f32 %v403, %v542
        %549 = vrot.lane.b32.xlu0 %v543, 32
        %v550 = vpop.permute.xlu0 %549
        %551 = vrot.lane.b32.xlu0 %v544, 32
        %v552 = vpop.permute.xlu0 %551
        %553 = vrot.lane.b32.xlu0 %v545, 32
        %v554 = vpop.permute.xlu0 %553
        %vm555 = vcmask 261120
        %v556 = vsel %vm555, %v550, %v552
        %v557 = vsel %vm555, %v552, %v554
        %v560 = vadd.f32 %v536, %v556
        %v561 = vadd.f32 %v537, %v557
        %v562 = vlaneseq
        %v563 = vshrl.u32 %v562, 7
        %v564 = vsub.s32 0, %v563
        %v565 = vrot.slane %v404, %v564
        %v566 = vlaneseq
        %v567 = vshrl.u32 %v566, 7
        %v568 = vsub.s32 0, %v567
        %v569 = vrot.slane %v405, %v568
        %v570 = vmul.f32 %v560, %v565
        %v571 = vmul.f32 %v561, %v569
        %v572 = vadd.f32 %v570, 0.0
        %v573 = vadd.f32 %v571, 0.0
        %s574 = sld [smem:[#allocation6 + $0x1]]
        %s575 = sld [smem:[#allocation6 + $0x81]]
        %v576 = vstv %s574
        %v577 = vstv %s575
        %v578 = vsel %vm408, %v576, %v577
        %v579 = vmul.f32 %v402, %v578
        %v580 = vmul.f32 %v398, %v578
        %v581 = vmul.f32 %v403, %v578
        %v582 = vadd.f32 %v579, 0.0
        %v583 = vadd.f32 %v580, 0.0
        %v584 = vadd.f32 %v581, 0.0
        %s585 = sld [smem:[#allocation6 + $0x8]]
        %s586 = sld [smem:[#allocation6 + $0x88]]
        %v587 = vstv %s585
        %v588 = vstv %s586
        %v589 = vsel %vm408, %v587, %v588
        %v590 = vmul.f32 %v402, %v589
        %v591 = vmul.f32 %v398, %v589
        %v592 = vmul.f32 %v403, %v589
        %596 = vrot.lane.b32.xlu0 %v590, 112
        %v597 = vpop.permute.xlu0 %596
        %598 = vrot.lane.b32.xlu0 %v591, 112
        %v599 = vpop.permute.xlu0 %598
        %600 = vrot.lane.b32.xlu0 %v592, 112
        %v601 = vpop.permute.xlu0 %600
        %v602 = vsel %vm435, %v597, %v599
        %v603 = vsel %vm435, %v599, %v601
        %v607 = vadd.f32 %v582, %v602
        %v608 = vadd.f32 %v583, %v603
        %v609 = vadd.f32 %v584, %v601
        %s610 = sld [smem:[#allocation6 + $0xf]]
        %s611 = sld [smem:[#allocation6 + $0x8f]]
        %v612 = vstv %s610
        %v613 = vstv %s611
        %v614 = vsel %vm408, %v612, %v613
        %v615 = vmul.f32 %v402, %v614
        %v616 = vmul.f32 %v398, %v614
        %v617 = vmul.f32 %v403, %v614
        %621 = vrot.lane.b32.xlu0 %v615, 96
        %v622 = vpop.permute.xlu0 %621
        %623 = vrot.lane.b32.xlu0 %v616, 96
        %v624 = vpop.permute.xlu0 %623
        %625 = vrot.lane.b32.xlu0 %v617, 96
        %v626 = vpop.permute.xlu0 %625
        %v627 = vsel %vm459, %v622, %v624
        %v628 = vsel %vm459, %v624, %v626
        %v632 = vadd.f32 %v607, %v627
        %v633 = vadd.f32 %v608, %v628
        %v634 = vadd.f32 %v609, %v626
        %s635 = sld [smem:[#allocation6 + $0x16]]
        %s636 = sld [smem:[#allocation6 + $0x96]]
        %v637 = vstv %s635
        %v638 = vstv %s636
        %v639 = vsel %vm408, %v637, %v638
        %v640 = vmul.f32 %v402, %v639
        %v641 = vmul.f32 %v398, %v639
        %v642 = vmul.f32 %v403, %v639
        %646 = vrot.lane.b32.xlu0 %v640, 80
        %v647 = vpop.permute.xlu0 %646
        %648 = vrot.lane.b32.xlu0 %v641, 80
        %v649 = vpop.permute.xlu0 %648
        %650 = vrot.lane.b32.xlu0 %v642, 80
        %v651 = vpop.permute.xlu0 %650
        %v652 = vsel %vm483, %v647, %v649
        %v653 = vsel %vm483, %v649, %v651
        %v657 = vadd.f32 %v632, %v652
        %v658 = vadd.f32 %v633, %v653
        %v659 = vadd.f32 %v634, %v651
        %s660 = sld [smem:[#allocation6 + $0x1d]]
        %s661 = sld [smem:[#allocation6 + $0x9d]]
        %v662 = vstv %s660
        %v663 = vstv %s661
        %v664 = vsel %vm408, %v662, %v663
        %v665 = vmul.f32 %v402, %v664
        %v666 = vmul.f32 %v398, %v664
        %v667 = vmul.f32 %v403, %v664
        %671 = vrot.lane.b32.xlu0 %v665, 64
        %v672 = vpop.permute.xlu0 %671
        %673 = vrot.lane.b32.xlu0 %v666, 64
        %v674 = vpop.permute.xlu0 %673
        %675 = vrot.lane.b32.xlu0 %v667, 64
        %v676 = vpop.permute.xlu0 %675
        %v677 = vsel %vm507, %v672, %v674
        %v678 = vsel %vm507, %v674, %v676
        %v682 = vadd.f32 %v657, %v677
        %v683 = vadd.f32 %v658, %v678
        %v684 = vadd.f32 %v659, %v676
        %s685 = sld [smem:[#allocation6 + $0x24]]
        %s686 = sld [smem:[#allocation6 + $0xa4]]
        %v687 = vstv %s685
        %v688 = vstv %s686
        %v689 = vsel %vm408, %v687, %v688
        %v690 = vmul.f32 %v402, %v689
        %v691 = vmul.f32 %v398, %v689
        %v692 = vmul.f32 %v403, %v689
        %696 = vrot.lane.b32.xlu0 %v690, 48
        %v697 = vpop.permute.xlu0 %696
        %698 = vrot.lane.b32.xlu0 %v691, 48
        %v699 = vpop.permute.xlu0 %698
        %700 = vrot.lane.b32.xlu0 %v692, 48
        %v701 = vpop.permute.xlu0 %700
        %v702 = vsel %vm531, %v697, %v699
        %v703 = vsel %vm531, %v699, %v701
        %v707 = vadd.f32 %v682, %v702
        %v708 = vadd.f32 %v683, %v703
        %v709 = vadd.f32 %v684, %v701
        %s710 = sld [smem:[#allocation6 + $0x2b]]
        %s711 = sld [smem:[#allocation6 + $0xab]]
        %v712 = vstv %s710
        %v713 = vstv %s711
        %v714 = vsel %vm408, %v712, %v713
        %v715 = vmul.f32 %v402, %v714
        %v716 = vmul.f32 %v398, %v714
        %v717 = vmul.f32 %v403, %v714
        %721 = vrot.lane.b32.xlu0 %v715, 32
        %v722 = vpop.permute.xlu0 %721
        %723 = vrot.lane.b32.xlu0 %v716, 32
        %v724 = vpop.permute.xlu0 %723
        %725 = vrot.lane.b32.xlu0 %v717, 32
        %v726 = vpop.permute.xlu0 %725
        %v727 = vsel %vm555, %v722, %v724
        %v728 = vsel %vm555, %v724, %v726
        %v732 = vadd.f32 %v707, %v727
        %v733 = vadd.f32 %v708, %v728
        %v734 = vadd.f32 %v709, %v726
        %v735 = vlaneseq
        %v736 = vshrl.u32 %v735, 7
        %v737 = vsub.s32 1, %v736
        %v738 = vrot.slane %v404, %v737
        %v739 = vlaneseq
        %v740 = vshrl.u32 %v739, 7
        %v741 = vsub.s32 1, %v740
        %v742 = vrot.slane %v405, %v741
        %745 = vrot.lane.b32.xlu0 %v738, 1
        %v746 = vpop.permute.xlu0 %745
        %747 = vrot.lane.b32.xlu0 %v742, 1
        %v748 = vpop.permute.xlu0 %747
        %vm749 = vcmask 7168
        %v750 = vsel %vm749, %v746, %v748
        %v754 = vmul.f32 %v732, %v746
        %v755 = vmul.f32 %v733, %v750
        %v756 = vmul.f32 %v734, %v748
        %760 = vrot.lane.b32.xlu0 %v754, 127
        %v761 = vpop.permute.xlu0 %760
        %762 = vrot.lane.b32.xlu0 %v755, 127
        %v763 = vpop.permute.xlu0 %762
        %764 = vrot.lane.b32.xlu0 %v756, 127
        %v765 = vpop.permute.xlu0 %764
        %vm766 = vcmask 1039360
        %v767 = vsel %vm766, %v761, %v763
        %v768 = vsel %vm766, %v763, %v765
        %v771 = vadd.f32 %v572, %v767
        %v772 = vadd.f32 %v573, %v768
        %s773 = sld [smem:[#allocation6 + $0x2]]
        %s774 = sld [smem:[#allocation6 + $0x82]]
        %v775 = vstv %s773
        %v776 = vstv %s774
        %v777 = vsel %vm408, %v775, %v776
        %v778 = vmul.f32 %v402, %v777
        %v779 = vmul.f32 %v398, %v777
        %v780 = vmul.f32 %v403, %v777
        %v781 = vadd.f32 %v778, 0.0
        %v782 = vadd.f32 %v779, 0.0
        %v783 = vadd.f32 %v780, 0.0
        %s784 = sld [smem:[#allocation6 + $0x9]]
        %s785 = sld [smem:[#allocation6 + $0x89]]
        %v786 = vstv %s784
        %v787 = vstv %s785
        %v788 = vsel %vm408, %v786, %v787
        %v789 = vmul.f32 %v402, %v788
        %v790 = vmul.f32 %v398, %v788
        %v791 = vmul.f32 %v403, %v788
        %795 = vrot.lane.b32.xlu0 %v789, 112
        %v796 = vpop.permute.xlu0 %795
        %797 = vrot.lane.b32.xlu0 %v790, 112
        %v798 = vpop.permute.xlu0 %797
        %799 = vrot.lane.b32.xlu0 %v791, 112
        %v800 = vpop.permute.xlu0 %799
        %v801 = vsel %vm435, %v796, %v798
        %v802 = vsel %vm435, %v798, %v800
        %v806 = vadd.f32 %v781, %v801
        %v807 = vadd.f32 %v782, %v802
        %v808 = vadd.f32 %v783, %v800
        %s809 = sld [smem:[#allocation6 + $0x10]]
        %s810 = sld [smem:[#allocation6 + $0x90]]
        %v811 = vstv %s809
        %v812 = vstv %s810
        %v813 = vsel %vm408, %v811, %v812
        %v814 = vmul.f32 %v402, %v813
        %v815 = vmul.f32 %v398, %v813
        %v816 = vmul.f32 %v403, %v813
        %820 = vrot.lane.b32.xlu0 %v814, 96
        %v821 = vpop.permute.xlu0 %820
        %822 = vrot.lane.b32.xlu0 %v815, 96
        %v823 = vpop.permute.xlu0 %822
        %824 = vrot.lane.b32.xlu0 %v816, 96
        %v825 = vpop.permute.xlu0 %824
        %v826 = vsel %vm459, %v821, %v823
        %v827 = vsel %vm459, %v823, %v825
        %v831 = vadd.f32 %v806, %v826
        %v832 = vadd.f32 %v807, %v827
        %v833 = vadd.f32 %v808, %v825
        %s834 = sld [smem:[#allocation6 + $0x17]]
        %s835 = sld [smem:[#allocation6 + $0x97]]
        %v836 = vstv %s834
        %v837 = vstv %s835
        %v838 = vsel %vm408, %v836, %v837
        %v839 = vmul.f32 %v402, %v838
        %v840 = vmul.f32 %v398, %v838
        %v841 = vmul.f32 %v403, %v838
        %845 = vrot.lane.b32.xlu0 %v839, 80
        %v846 = vpop.permute.xlu0 %845
        %847 = vrot.lane.b32.xlu0 %v840, 80
        %v848 = vpop.permute.xlu0 %847
        %849 = vrot.lane.b32.xlu0 %v841, 80
        %v850 = vpop.permute.xlu0 %849
        %v851 = vsel %vm483, %v846, %v848
        %v852 = vsel %vm483, %v848, %v850
        %v856 = vadd.f32 %v831, %v851
        %v857 = vadd.f32 %v832, %v852
        %v858 = vadd.f32 %v833, %v850
        %s859 = sld [smem:[#allocation6 + $0x1e]]
        %s860 = sld [smem:[#allocation6 + $0x9e]]
        %v861 = vstv %s859
        %v862 = vstv %s860
        %v863 = vsel %vm408, %v861, %v862
        %v864 = vmul.f32 %v402, %v863
        %v865 = vmul.f32 %v398, %v863
        %v866 = vmul.f32 %v403, %v863
        %870 = vrot.lane.b32.xlu0 %v864, 64
        %v871 = vpop.permute.xlu0 %870
        %872 = vrot.lane.b32.xlu0 %v865, 64
        %v873 = vpop.permute.xlu0 %872
        %874 = vrot.lane.b32.xlu0 %v866, 64
        %v875 = vpop.permute.xlu0 %874
        %v876 = vsel %vm507, %v871, %v873
        %v877 = vsel %vm507, %v873, %v875
        %v881 = vadd.f32 %v856, %v876
        %v882 = vadd.f32 %v857, %v877
        %v883 = vadd.f32 %v858, %v875
        %s884 = sld [smem:[#allocation6 + $0x25]]
        %s885 = sld [smem:[#allocation6 + $0xa5]]
        %v886 = vstv %s884
        %v887 = vstv %s885
        %v888 = vsel %vm408, %v886, %v887
        %v889 = vmul.f32 %v402, %v888
        %v890 = vmul.f32 %v398, %v888
        %v891 = vmul.f32 %v403, %v888
        %895 = vrot.lane.b32.xlu0 %v889, 48
        %v896 = vpop.permute.xlu0 %895
        %897 = vrot.lane.b32.xlu0 %v890, 48
        %v898 = vpop.permute.xlu0 %897
        %899 = vrot.lane.b32.xlu0 %v891, 48
        %v900 = vpop.permute.xlu0 %899
        %v901 = vsel %vm531, %v896, %v898
        %v902 = vsel %vm531, %v898, %v900
        %v906 = vadd.f32 %v881, %v901
        %v907 = vadd.f32 %v882, %v902
        %v908 = vadd.f32 %v883, %v900
        %s909 = sld [smem:[#allocation6 + $0x2c]]
        %s910 = sld [smem:[#allocation6 + $0xac]]
        %v911 = vstv %s909
        %v912 = vstv %s910
        %v913 = vsel %vm408, %v911, %v912
        %v914 = vmul.f32 %v402, %v913
        %v915 = vmul.f32 %v398, %v913
        %v916 = vmul.f32 %v403, %v913
        %920 = vrot.lane.b32.xlu0 %v914, 32
        %v921 = vpop.permute.xlu0 %920
        %922 = vrot.lane.b32.xlu0 %v915, 32
        %v923 = vpop.permute.xlu0 %922
        %924 = vrot.lane.b32.xlu0 %v916, 32
        %v925 = vpop.permute.xlu0 %924
        %v926 = vsel %vm555, %v921, %v923
        %v927 = vsel %vm555, %v923, %v925
        %v931 = vadd.f32 %v906, %v926
        %v932 = vadd.f32 %v907, %v927
        %v933 = vadd.f32 %v908, %v925
        %v934 = vlaneseq
        %v935 = vshrl.u32 %v934, 7
        %v936 = vsub.s32 2, %v935
        %v937 = vrot.slane %v404, %v936
        %v938 = vlaneseq
        %v939 = vshrl.u32 %v938, 7
        %v940 = vsub.s32 2, %v939
        %v941 = vrot.slane %v405, %v940
        %944 = vrot.lane.b32.xlu0 %v937, 2
        %v945 = vpop.permute.xlu0 %944
        %946 = vrot.lane.b32.xlu0 %v941, 2
        %v947 = vpop.permute.xlu0 %946
        %vm948 = vcmask 15360
        %v949 = vsel %vm948, %v945, %v947
        %v953 = vmul.f32 %v931, %v945
        %v954 = vmul.f32 %v932, %v949
        %v955 = vmul.f32 %v933, %v947
        %959 = vrot.lane.b32.xlu0 %v953, 126
        %v960 = vpop.permute.xlu0 %959
        %961 = vrot.lane.b32.xlu0 %v954, 126
        %v962 = vpop.permute.xlu0 %961
        %963 = vrot.lane.b32.xlu0 %v955, 126
        %v964 = vpop.permute.xlu0 %963
        %vm965 = vcmask 1031168
        %v966 = vsel %vm965, %v960, %v962
        %v967 = vsel %vm965, %v962, %v964
        %v970 = vadd.f32 %v771, %v966
        %v971 = vadd.f32 %v772, %v967
        %s972 = sld [smem:[#allocation6 + $0x3]]
        %s973 = sld [smem:[#allocation6 + $0x83]]
        %v974 = vstv %s972
        %v975 = vstv %s973
        %v976 = vsel %vm408, %v974, %v975
        %v977 = vmul.f32 %v402, %v976
        %v978 = vmul.f32 %v398, %v976
        %v979 = vmul.f32 %v403, %v976
        %v980 = vadd.f32 %v977, 0.0
        %v981 = vadd.f32 %v978, 0.0
        %v982 = vadd.f32 %v979, 0.0
        %s983 = sld [smem:[#allocation6 + $0xa]]
        %s984 = sld [smem:[#allocation6 + $0x8a]]
        %v985 = vstv %s983
        %v986 = vstv %s984
        %v987 = vsel %vm408, %v985, %v986
        %v988 = vmul.f32 %v402, %v987
        %v989 = vmul.f32 %v398, %v987
        %v990 = vmul.f32 %v403, %v987
        %994 = vrot.lane.b32.xlu0 %v988, 112
        %v995 = vpop.permute.xlu0 %994
        %996 = vrot.lane.b32.xlu0 %v989, 112
        %v997 = vpop.permute.xlu0 %996
        %998 = vrot.lane.b32.xlu0 %v990, 112
        %v999 = vpop.permute.xlu0 %998
        %v1000 = vsel %vm435, %v995, %v997
        %v1001 = vsel %vm435, %v997, %v999
        %v1005 = vadd.f32 %v980, %v1000
        %v1006 = vadd.f32 %v981, %v1001
        %v1007 = vadd.f32 %v982, %v999
        %s1008 = sld [smem:[#allocation6 + $0x11]]
        %s1009 = sld [smem:[#allocation6 + $0x91]]
        %v1010 = vstv %s1008
        %v1011 = vstv %s1009
        %v1012 = vsel %vm408, %v1010, %v1011
        %v1013 = vmul.f32 %v402, %v1012
        %v1014 = vmul.f32 %v398, %v1012
        %v1015 = vmul.f32 %v403, %v1012
        %1019 = vrot.lane.b32.xlu0 %v1013, 96
        %v1020 = vpop.permute.xlu0 %1019
        %1021 = vrot.lane.b32.xlu0 %v1014, 96
        %v1022 = vpop.permute.xlu0 %1021
        %1023 = vrot.lane.b32.xlu0 %v1015, 96
        %v1024 = vpop.permute.xlu0 %1023
        %v1025 = vsel %vm459, %v1020, %v1022
        %v1026 = vsel %vm459, %v1022, %v1024
        %v1030 = vadd.f32 %v1005, %v1025
        %v1031 = vadd.f32 %v1006, %v1026
        %v1032 = vadd.f32 %v1007, %v1024
        %s1033 = sld [smem:[#allocation6 + $0x18]]
        %s1034 = sld [smem:[#allocation6 + $0x98]]
        %v1035 = vstv %s1033
        %v1036 = vstv %s1034
        %v1037 = vsel %vm408, %v1035, %v1036
        %v1038 = vmul.f32 %v402, %v1037
        %v1039 = vmul.f32 %v398, %v1037
        %v1040 = vmul.f32 %v403, %v1037
        %1044 = vrot.lane.b32.xlu0 %v1038, 80
        %v1045 = vpop.permute.xlu0 %1044
        %1046 = vrot.lane.b32.xlu0 %v1039, 80
        %v1047 = vpop.permute.xlu0 %1046
        %1048 = vrot.lane.b32.xlu0 %v1040, 80
        %v1049 = vpop.permute.xlu0 %1048
        %v1050 = vsel %vm483, %v1045, %v1047
        %v1051 = vsel %vm483, %v1047, %v1049
        %v1055 = vadd.f32 %v1030, %v1050
        %v1056 = vadd.f32 %v1031, %v1051
        %v1057 = vadd.f32 %v1032, %v1049
        %s1058 = sld [smem:[#allocation6 + $0x1f]]
        %s1059 = sld [smem:[#allocation6 + $0x9f]]
        %v1060 = vstv %s1058
        %v1061 = vstv %s1059
        %v1062 = vsel %vm408, %v1060, %v1061
        %v1063 = vmul.f32 %v402, %v1062
        %v1064 = vmul.f32 %v398, %v1062
        %v1065 = vmul.f32 %v403, %v1062
        %1069 = vrot.lane.b32.xlu0 %v1063, 64
        %v1070 = vpop.permute.xlu0 %1069
        %1071 = vrot.lane.b32.xlu0 %v1064, 64
        %v1072 = vpop.permute.xlu0 %1071
        %1073 = vrot.lane.b32.xlu0 %v1065, 64
        %v1074 = vpop.permute.xlu0 %1073
        %v1075 = vsel %vm507, %v1070, %v1072
        %v1076 = vsel %vm507, %v1072, %v1074
        %v1080 = vadd.f32 %v1055, %v1075
        %v1081 = vadd.f32 %v1056, %v1076
        %v1082 = vadd.f32 %v1057, %v1074
        %s1083 = sld [smem:[#allocation6 + $0x26]]
        %s1084 = sld [smem:[#allocation6 + $0xa6]]
        %v1085 = vstv %s1083
        %v1086 = vstv %s1084
        %v1087 = vsel %vm408, %v1085, %v1086
        %v1088 = vmul.f32 %v402, %v1087
        %v1089 = vmul.f32 %v398, %v1087
        %v1090 = vmul.f32 %v403, %v1087
        %1094 = vrot.lane.b32.xlu0 %v1088, 48
        %v1095 = vpop.permute.xlu0 %1094
        %1096 = vrot.lane.b32.xlu0 %v1089, 48
        %v1097 = vpop.permute.xlu0 %1096
        %1098 = vrot.lane.b32.xlu0 %v1090, 48
        %v1099 = vpop.permute.xlu0 %1098
        %v1100 = vsel %vm531, %v1095, %v1097
        %v1101 = vsel %vm531, %v1097, %v1099
        %v1105 = vadd.f32 %v1080, %v1100
        %v1106 = vadd.f32 %v1081, %v1101
        %v1107 = vadd.f32 %v1082, %v1099
        %s1108 = sld [smem:[#allocation6 + $0x2d]]
        %s1109 = sld [smem:[#allocation6 + $0xad]]
        %v1110 = vstv %s1108
        %v1111 = vstv %s1109
        %v1112 = vsel %vm408, %v1110, %v1111
        %v1113 = vmul.f32 %v402, %v1112
        %v1114 = vmul.f32 %v398, %v1112
        %v1115 = vmul.f32 %v403, %v1112
        %1119 = vrot.lane.b32.xlu0 %v1113, 32
        %v1120 = vpop.permute.xlu0 %1119
        %1121 = vrot.lane.b32.xlu0 %v1114, 32
        %v1122 = vpop.permute.xlu0 %1121
        %1123 = vrot.lane.b32.xlu0 %v1115, 32
        %v1124 = vpop.permute.xlu0 %1123
        %v1125 = vsel %vm555, %v1120, %v1122
        %v1126 = vsel %vm555, %v1122, %v1124
        %v1130 = vadd.f32 %v1105, %v1125
        %v1131 = vadd.f32 %v1106, %v1126
        %v1132 = vadd.f32 %v1107, %v1124
        %1136 = vrot.lane.b32.xlu0 %v1130, 125
        %v1137 = vpop.permute.xlu0 %1136
        %1138 = vrot.lane.b32.xlu0 %v1131, 125
        %v1139 = vpop.permute.xlu0 %1138
        %1140 = vrot.lane.b32.xlu0 %v1132, 125
        %v1141 = vpop.permute.xlu0 %1140
        %vm1142 = vcmask 1022976
        %v1143 = vsel %vm1142, %v1137, %v1139
        %v1144 = vsel %vm1142, %v1139, %v1141
        %v1147 = vadd.f32 %v970, %v1143
        %v1148 = vadd.f32 %v971, %v1144
        %s1149 = sld [smem:[#allocation6 + $0x4]]
        %s1150 = sld [smem:[#allocation6 + $0x84]]
        %v1151 = vstv %s1149
        %v1152 = vstv %s1150
        %v1153 = vsel %vm408, %v1151, %v1152
        %v1154 = vmul.f32 %v402, %v1153
        %v1155 = vmul.f32 %v398, %v1153
        %v1156 = vmul.f32 %v403, %v1153
        %v1157 = vadd.f32 %v1154, 0.0
        %v1158 = vadd.f32 %v1155, 0.0
        %v1159 = vadd.f32 %v1156, 0.0
        %s1160 = sld [smem:[#allocation6 + $0xb]]
        %s1161 = sld [smem:[#allocation6 + $0x8b]]
        %v1162 = vstv %s1160
        %v1163 = vstv %s1161
        %v1164 = vsel %vm408, %v1162, %v1163
        %v1165 = vmul.f32 %v402, %v1164
        %v1166 = vmul.f32 %v398, %v1164
        %v1167 = vmul.f32 %v403, %v1164
        %1171 = vrot.lane.b32.xlu0 %v1165, 112
        %v1172 = vpop.permute.xlu0 %1171
        %1173 = vrot.lane.b32.xlu0 %v1166, 112
        %v1174 = vpop.permute.xlu0 %1173
        %1175 = vrot.lane.b32.xlu0 %v1167, 112
        %v1176 = vpop.permute.xlu0 %1175
        %v1177 = vsel %vm435, %v1172, %v1174
        %v1178 = vsel %vm435, %v1174, %v1176
        %v1182 = vadd.f32 %v1157, %v1177
        %v1183 = vadd.f32 %v1158, %v1178
        %v1184 = vadd.f32 %v1159, %v1176
        %s1185 = sld [smem:[#allocation6 + $0x12]]
        %s1186 = sld [smem:[#allocation6 + $0x92]]
        %v1187 = vstv %s1185
        %v1188 = vstv %s1186
        %v1189 = vsel %vm408, %v1187, %v1188
        %v1190 = vmul.f32 %v402, %v1189
        %v1191 = vmul.f32 %v398, %v1189
        %v1192 = vmul.f32 %v403, %v1189
        %1196 = vrot.lane.b32.xlu0 %v1190, 96
        %v1197 = vpop.permute.xlu0 %1196
        %1198 = vrot.lane.b32.xlu0 %v1191, 96
        %v1199 = vpop.permute.xlu0 %1198
        %1200 = vrot.lane.b32.xlu0 %v1192, 96
        %v1201 = vpop.permute.xlu0 %1200
        %v1202 = vsel %vm459, %v1197, %v1199
        %v1203 = vsel %vm459, %v1199, %v1201
        %v1207 = vadd.f32 %v1182, %v1202
        %v1208 = vadd.f32 %v1183, %v1203
        %v1209 = vadd.f32 %v1184, %v1201
        %s1210 = sld [smem:[#allocation6 + $0x19]]
        %s1211 = sld [smem:[#allocation6 + $0x99]]
        %v1212 = vstv %s1210
        %v1213 = vstv %s1211
        %v1214 = vsel %vm408, %v1212, %v1213
        %v1215 = vmul.f32 %v402, %v1214
        %v1216 = vmul.f32 %v398, %v1214
        %v1217 = vmul.f32 %v403, %v1214
        %1221 = vrot.lane.b32.xlu0 %v1215, 80
        %v1222 = vpop.permute.xlu0 %1221
        %1223 = vrot.lane.b32.xlu0 %v1216, 80
        %v1224 = vpop.permute.xlu0 %1223
        %1225 = vrot.lane.b32.xlu0 %v1217, 80
        %v1226 = vpop.permute.xlu0 %1225
        %v1227 = vsel %vm483, %v1222, %v1224
        %v1228 = vsel %vm483, %v1224, %v1226
        %v1232 = vadd.f32 %v1207, %v1227
        %v1233 = vadd.f32 %v1208, %v1228
        %v1234 = vadd.f32 %v1209, %v1226
        %s1235 = sld [smem:[#allocation6 + $0x20]]
        %s1236 = sld [smem:[#allocation6 + $0xa0]]
        %v1237 = vstv %s1235
        %v1238 = vstv %s1236
        %v1239 = vsel %vm408, %v1237, %v1238
        %v1240 = vmul.f32 %v402, %v1239
        %v1241 = vmul.f32 %v398, %v1239
        %v1242 = vmul.f32 %v403, %v1239
        %1246 = vrot.lane.b32.xlu0 %v1240, 64
        %v1247 = vpop.permute.xlu0 %1246
        %1248 = vrot.lane.b32.xlu0 %v1241, 64
        %v1249 = vpop.permute.xlu0 %1248
        %1250 = vrot.lane.b32.xlu0 %v1242, 64
        %v1251 = vpop.permute.xlu0 %1250
        %v1252 = vsel %vm507, %v1247, %v1249
        %v1253 = vsel %vm507, %v1249, %v1251
        %v1257 = vadd.f32 %v1232, %v1252
        %v1258 = vadd.f32 %v1233, %v1253
        %v1259 = vadd.f32 %v1234, %v1251
        %s1260 = sld [smem:[#allocation6 + $0x27]]
        %s1261 = sld [smem:[#allocation6 + $0xa7]]
        %v1262 = vstv %s1260
        %v1263 = vstv %s1261
        %v1264 = vsel %vm408, %v1262, %v1263
        %v1265 = vmul.f32 %v402, %v1264
        %v1266 = vmul.f32 %v398, %v1264
        %v1267 = vmul.f32 %v403, %v1264
        %1271 = vrot.lane.b32.xlu0 %v1265, 48
        %v1272 = vpop.permute.xlu0 %1271
        %1273 = vrot.lane.b32.xlu0 %v1266, 48
        %v1274 = vpop.permute.xlu0 %1273
        %1275 = vrot.lane.b32.xlu0 %v1267, 48
        %v1276 = vpop.permute.xlu0 %1275
        %v1277 = vsel %vm531, %v1272, %v1274
        %v1278 = vsel %vm531, %v1274, %v1276
        %v1282 = vadd.f32 %v1257, %v1277
        %v1283 = vadd.f32 %v1258, %v1278
        %v1284 = vadd.f32 %v1259, %v1276
        %s1285 = sld [smem:[#allocation6 + $0x2e]]
        %s1286 = sld [smem:[#allocation6 + $0xae]]
        %v1287 = vstv %s1285
        %v1288 = vstv %s1286
        %v1289 = vsel %vm408, %v1287, %v1288
        %v1290 = vmul.f32 %v402, %v1289
        %v1291 = vmul.f32 %v398, %v1289
        %v1292 = vmul.f32 %v403, %v1289
        %1296 = vrot.lane.b32.xlu0 %v1290, 32
        %v1297 = vpop.permute.xlu0 %1296
        %1298 = vrot.lane.b32.xlu0 %v1291, 32
        %v1299 = vpop.permute.xlu0 %1298
        %1300 = vrot.lane.b32.xlu0 %v1292, 32
        %v1301 = vpop.permute.xlu0 %1300
        %v1302 = vsel %vm555, %v1297, %v1299
        %v1303 = vsel %vm555, %v1299, %v1301
        %v1307 = vadd.f32 %v1282, %v1302
        %v1308 = vadd.f32 %v1283, %v1303
        %v1309 = vadd.f32 %v1284, %v1301
        %v1310 = vlaneseq
        %v1311 = vshrl.u32 %v1310, 7
        %v1312 = vsub.s32 4, %v1311
        %v1313 = vrot.slane %v404, %v1312
        %v1314 = vlaneseq
        %v1315 = vshrl.u32 %v1314, 7
        %v1316 = vsub.s32 4, %v1315
        %v1317 = vrot.slane %v405, %v1316
        %1320 = vrot.lane.b32.xlu0 %v1313, 4
        %v1321 = vpop.permute.xlu0 %1320
        %1322 = vrot.lane.b32.xlu0 %v1317, 4
        %v1323 = vpop.permute.xlu0 %1322
        %v1324 = vsel %vm318, %v1321, %v1323
        %v1328 = vmul.f32 %v1307, %v1321
        %v1329 = vmul.f32 %v1308, %v1324
        %v1330 = vmul.f32 %v1309, %v1323
        %1334 = vrot.lane.b32.xlu0 %v1328, 124
        %v1335 = vpop.permute.xlu0 %1334
        %1336 = vrot.lane.b32.xlu0 %v1329, 124
        %v1337 = vpop.permute.xlu0 %1336
        %1338 = vrot.lane.b32.xlu0 %v1330, 124
        %v1339 = vpop.permute.xlu0 %1338
        %vm1340 = vcmask 1014784
        %v1341 = vsel %vm1340, %v1335, %v1337
        %v1342 = vsel %vm1340, %v1337, %v1339
        %v1345 = vadd.f32 %v1147, %v1341
        %v1346 = vadd.f32 %v1148, %v1342
        %s1347 = sld [smem:[#allocation6 + $0x5]]
        %s1348 = sld [smem:[#allocation6 + $0x85]]
        %v1349 = vstv %s1347
        %v1350 = vstv %s1348
        %v1351 = vsel %vm408, %v1349, %v1350
        %v1352 = vmul.f32 %v402, %v1351
        %v1353 = vmul.f32 %v398, %v1351
        %v1354 = vmul.f32 %v403, %v1351
        %v1355 = vadd.f32 %v1352, 0.0
        %v1356 = vadd.f32 %v1353, 0.0
        %v1357 = vadd.f32 %v1354, 0.0
        %s1358 = sld [smem:[#allocation6 + $0xc]]
        %s1359 = sld [smem:[#allocation6 + $0x8c]]
        %v1360 = vstv %s1358
        %v1361 = vstv %s1359
        %v1362 = vsel %vm408, %v1360, %v1361
        %v1363 = vmul.f32 %v402, %v1362
        %v1364 = vmul.f32 %v398, %v1362
        %v1365 = vmul.f32 %v403, %v1362
        %1369 = vrot.lane.b32.xlu0 %v1363, 112
        %v1370 = vpop.permute.xlu0 %1369
        %1371 = vrot.lane.b32.xlu0 %v1364, 112
        %v1372 = vpop.permute.xlu0 %1371
        %1373 = vrot.lane.b32.xlu0 %v1365, 112
        %v1374 = vpop.permute.xlu0 %1373
        %v1375 = vsel %vm435, %v1370, %v1372
        %v1376 = vsel %vm435, %v1372, %v1374
        %v1380 = vadd.f32 %v1355, %v1375
        %v1381 = vadd.f32 %v1356, %v1376
        %v1382 = vadd.f32 %v1357, %v1374
        %s1383 = sld [smem:[#allocation6 + $0x13]]
        %s1384 = sld [smem:[#allocation6 + $0x93]]
        %v1385 = vstv %s1383
        %v1386 = vstv %s1384
        %v1387 = vsel %vm408, %v1385, %v1386
        %v1388 = vmul.f32 %v402, %v1387
        %v1389 = vmul.f32 %v398, %v1387
        %v1390 = vmul.f32 %v403, %v1387
        %1394 = vrot.lane.b32.xlu0 %v1388, 96
        %v1395 = vpop.permute.xlu0 %1394
        %1396 = vrot.lane.b32.xlu0 %v1389, 96
        %v1397 = vpop.permute.xlu0 %1396
        %1398 = vrot.lane.b32.xlu0 %v1390, 96
        %v1399 = vpop.permute.xlu0 %1398
        %v1400 = vsel %vm459, %v1395, %v1397
        %v1401 = vsel %vm459, %v1397, %v1399
        %v1405 = vadd.f32 %v1380, %v1400
        %v1406 = vadd.f32 %v1381, %v1401
        %v1407 = vadd.f32 %v1382, %v1399
        %s1408 = sld [smem:[#allocation6 + $0x1a]]
        %s1409 = sld [smem:[#allocation6 + $0x9a]]
        %v1410 = vstv %s1408
        %v1411 = vstv %s1409
        %v1412 = vsel %vm408, %v1410, %v1411
        %v1413 = vmul.f32 %v402, %v1412
        %v1414 = vmul.f32 %v398, %v1412
        %v1415 = vmul.f32 %v403, %v1412
        %1419 = vrot.lane.b32.xlu0 %v1413, 80
        %v1420 = vpop.permute.xlu0 %1419
        %1421 = vrot.lane.b32.xlu0 %v1414, 80
        %v1422 = vpop.permute.xlu0 %1421
        %1423 = vrot.lane.b32.xlu0 %v1415, 80
        %v1424 = vpop.permute.xlu0 %1423
        %v1425 = vsel %vm483, %v1420, %v1422
        %v1426 = vsel %vm483, %v1422, %v1424
        %v1430 = vadd.f32 %v1405, %v1425
        %v1431 = vadd.f32 %v1406, %v1426
        %v1432 = vadd.f32 %v1407, %v1424
        %s1433 = sld [smem:[#allocation6 + $0x21]]
        %s1434 = sld [smem:[#allocation6 + $0xa1]]
        %v1435 = vstv %s1433
        %v1436 = vstv %s1434
        %v1437 = vsel %vm408, %v1435, %v1436
        %v1438 = vmul.f32 %v402, %v1437
        %v1439 = vmul.f32 %v398, %v1437
        %v1440 = vmul.f32 %v403, %v1437
        %1444 = vrot.lane.b32.xlu0 %v1438, 64
        %v1445 = vpop.permute.xlu0 %1444
        %1446 = vrot.lane.b32.xlu0 %v1439, 64
        %v1447 = vpop.permute.xlu0 %1446
        %1448 = vrot.lane.b32.xlu0 %v1440, 64
        %v1449 = vpop.permute.xlu0 %1448
        %v1450 = vsel %vm507, %v1445, %v1447
        %v1451 = vsel %vm507, %v1447, %v1449
        %v1455 = vadd.f32 %v1430, %v1450
        %v1456 = vadd.f32 %v1431, %v1451
        %v1457 = vadd.f32 %v1432, %v1449
        %s1458 = sld [smem:[#allocation6 + $0x28]]
        %s1459 = sld [smem:[#allocation6 + $0xa8]]
        %v1460 = vstv %s1458
        %v1461 = vstv %s1459
        %v1462 = vsel %vm408, %v1460, %v1461
        %v1463 = vmul.f32 %v402, %v1462
        %v1464 = vmul.f32 %v398, %v1462
        %v1465 = vmul.f32 %v403, %v1462
        %1469 = vrot.lane.b32.xlu0 %v1463, 48
        %v1470 = vpop.permute.xlu0 %1469
        %1471 = vrot.lane.b32.xlu0 %v1464, 48
        %v1472 = vpop.permute.xlu0 %1471
        %1473 = vrot.lane.b32.xlu0 %v1465, 48
        %v1474 = vpop.permute.xlu0 %1473
        %v1475 = vsel %vm531, %v1470, %v1472
        %v1476 = vsel %vm531, %v1472, %v1474
        %v1480 = vadd.f32 %v1455, %v1475
        %v1481 = vadd.f32 %v1456, %v1476
        %v1482 = vadd.f32 %v1457, %v1474
        %s1483 = sld [smem:[#allocation6 + $0x2f]]
        %s1484 = sld [smem:[#allocation6 + $0xaf]]
        %v1485 = vstv %s1483
        %v1486 = vstv %s1484
        %v1487 = vsel %vm408, %v1485, %v1486
        %v1488 = vmul.f32 %v402, %v1487
        %v1489 = vmul.f32 %v398, %v1487
        %v1490 = vmul.f32 %v403, %v1487
        %1494 = vrot.lane.b32.xlu0 %v1488, 32
        %v1495 = vpop.permute.xlu0 %1494
        %1496 = vrot.lane.b32.xlu0 %v1489, 32
        %v1497 = vpop.permute.xlu0 %1496
        %1498 = vrot.lane.b32.xlu0 %v1490, 32
        %v1499 = vpop.permute.xlu0 %1498
        %v1500 = vsel %vm555, %v1495, %v1497
        %v1501 = vsel %vm555, %v1497, %v1499
        %v1505 = vadd.f32 %v1480, %v1500
        %v1506 = vadd.f32 %v1481, %v1501
        %v1507 = vadd.f32 %v1482, %v1499
        %v1508 = vlaneseq
        %v1509 = vshrl.u32 %v1508, 7
        %v1510 = vsub.s32 5, %v1509
        %v1511 = vrot.slane %v404, %v1510
        %v1512 = vlaneseq
        %v1513 = vshrl.u32 %v1512, 7
        %v1514 = vsub.s32 5, %v1513
        %v1515 = vrot.slane %v405, %v1514
        %1518 = vrot.lane.b32.xlu0 %v1511, 5
        %v1519 = vpop.permute.xlu0 %1518
        %1520 = vrot.lane.b32.xlu0 %v1515, 5
        %v1521 = vpop.permute.xlu0 %1520
        %vm1522 = vcmask 39936
        %v1523 = vsel %vm1522, %v1519, %v1521
        %v1527 = vmul.f32 %v1505, %v1519
        %v1528 = vmul.f32 %v1506, %v1523
        %v1529 = vmul.f32 %v1507, %v1521
        %1533 = vrot.lane.b32.xlu0 %v1527, 123
        %v1534 = vpop.permute.xlu0 %1533
        %1535 = vrot.lane.b32.xlu0 %v1528, 123
        %v1536 = vpop.permute.xlu0 %1535
        %1537 = vrot.lane.b32.xlu0 %v1529, 123
        %v1538 = vpop.permute.xlu0 %1537
        %vm1539 = vcmask 1006592
        %v1540 = vsel %vm1539, %v1534, %v1536
        %v1541 = vsel %vm1539, %v1536, %v1538
        %v1544 = vadd.f32 %v1345, %v1540
        %v1545 = vadd.f32 %v1346, %v1541
        %s1546 = sld [smem:[#allocation6 + $0x6]]
        %s1547 = sld [smem:[#allocation6 + $0x86]]
        %v1548 = vstv %s1546
        %v1549 = vstv %s1547
        %v1550 = vsel %vm408, %v1548, %v1549
        %v1551 = vmul.f32 %v402, %v1550
        %v1552 = vmul.f32 %v398, %v1550
        %v1553 = vmul.f32 %v403, %v1550
        %v1554 = vadd.f32 %v1551, 0.0
        %v1555 = vadd.f32 %v1552, 0.0
        %v1556 = vadd.f32 %v1553, 0.0
        %s1557 = sld [smem:[#allocation6 + $0xd]]
        %s1558 = sld [smem:[#allocation6 + $0x8d]]
        %v1559 = vstv %s1557
        %v1560 = vstv %s1558
        %v1561 = vsel %vm408, %v1559, %v1560
        %v1562 = vmul.f32 %v402, %v1561
        %v1563 = vmul.f32 %v398, %v1561
        %v1564 = vmul.f32 %v403, %v1561
        %1568 = vrot.lane.b32.xlu0 %v1562, 112
        %v1569 = vpop.permute.xlu0 %1568
        %1570 = vrot.lane.b32.xlu0 %v1563, 112
        %v1571 = vpop.permute.xlu0 %1570
        %1572 = vrot.lane.b32.xlu0 %v1564, 112
        %v1573 = vpop.permute.xlu0 %1572
        %v1574 = vsel %vm435, %v1569, %v1571
        %v1575 = vsel %vm435, %v1571, %v1573
        %v1579 = vadd.f32 %v1554, %v1574
        %v1580 = vadd.f32 %v1555, %v1575
        %v1581 = vadd.f32 %v1556, %v1573
        %s1582 = sld [smem:[#allocation6 + $0x14]]
        %s1583 = sld [smem:[#allocation6 + $0x94]]
        %v1584 = vstv %s1582
        %v1585 = vstv %s1583
        %v1586 = vsel %vm408, %v1584, %v1585
        %v1587 = vmul.f32 %v402, %v1586
        %v1588 = vmul.f32 %v398, %v1586
        %v1589 = vmul.f32 %v403, %v1586
        %1593 = vrot.lane.b32.xlu0 %v1587, 96
        %v1594 = vpop.permute.xlu0 %1593
        %1595 = vrot.lane.b32.xlu0 %v1588, 96
        %v1596 = vpop.permute.xlu0 %1595
        %1597 = vrot.lane.b32.xlu0 %v1589, 96
        %v1598 = vpop.permute.xlu0 %1597
        %v1599 = vsel %vm459, %v1594, %v1596
        %v1600 = vsel %vm459, %v1596, %v1598
        %v1604 = vadd.f32 %v1579, %v1599
        %v1605 = vadd.f32 %v1580, %v1600
        %v1606 = vadd.f32 %v1581, %v1598
        %s1607 = sld [smem:[#allocation6 + $0x1b]]
        %s1608 = sld [smem:[#allocation6 + $0x9b]]
        %v1609 = vstv %s1607
        %v1610 = vstv %s1608
        %v1611 = vsel %vm408, %v1609, %v1610
        %v1612 = vmul.f32 %v402, %v1611
        %v1613 = vmul.f32 %v398, %v1611
        %v1614 = vmul.f32 %v403, %v1611
        %1618 = vrot.lane.b32.xlu0 %v1612, 80
        %v1619 = vpop.permute.xlu0 %1618
        %1620 = vrot.lane.b32.xlu0 %v1613, 80
        %v1621 = vpop.permute.xlu0 %1620
        %1622 = vrot.lane.b32.xlu0 %v1614, 80
        %v1623 = vpop.permute.xlu0 %1622
        %v1624 = vsel %vm483, %v1619, %v1621
        %v1625 = vsel %vm483, %v1621, %v1623
        %v1629 = vadd.f32 %v1604, %v1624
        %v1630 = vadd.f32 %v1605, %v1625
        %v1631 = vadd.f32 %v1606, %v1623
        %s1632 = sld [smem:[#allocation6 + $0x22]]
        %s1633 = sld [smem:[#allocation6 + $0xa2]]
        %v1634 = vstv %s1632
        %v1635 = vstv %s1633
        %v1636 = vsel %vm408, %v1634, %v1635
        %v1637 = vmul.f32 %v402, %v1636
        %v1638 = vmul.f32 %v398, %v1636
        %v1639 = vmul.f32 %v403, %v1636
        %1643 = vrot.lane.b32.xlu0 %v1637, 64
        %v1644 = vpop.permute.xlu0 %1643
        %1645 = vrot.lane.b32.xlu0 %v1638, 64
        %v1646 = vpop.permute.xlu0 %1645
        %1647 = vrot.lane.b32.xlu0 %v1639, 64
        %v1648 = vpop.permute.xlu0 %1647
        %v1649 = vsel %vm507, %v1644, %v1646
        %v1650 = vsel %vm507, %v1646, %v1648
        %v1654 = vadd.f32 %v1629, %v1649
        %v1655 = vadd.f32 %v1630, %v1650
        %v1656 = vadd.f32 %v1631, %v1648
        %s1657 = sld [smem:[#allocation6 + $0x29]]
        %s1658 = sld [smem:[#allocation6 + $0xa9]]
        %v1659 = vstv %s1657
        %v1660 = vstv %s1658
        %v1661 = vsel %vm408, %v1659, %v1660
        %v1662 = vmul.f32 %v402, %v1661
        %v1663 = vmul.f32 %v398, %v1661
        %v1664 = vmul.f32 %v403, %v1661
        %1668 = vrot.lane.b32.xlu0 %v1662, 48
        %v1669 = vpop.permute.xlu0 %1668
        %1670 = vrot.lane.b32.xlu0 %v1663, 48
        %v1671 = vpop.permute.xlu0 %1670
        %1672 = vrot.lane.b32.xlu0 %v1664, 48
        %v1673 = vpop.permute.xlu0 %1672
        %v1674 = vsel %vm531, %v1669, %v1671
        %v1675 = vsel %vm531, %v1671, %v1673
        %v1679 = vadd.f32 %v1654, %v1674
        %v1680 = vadd.f32 %v1655, %v1675
        %v1681 = vadd.f32 %v1656, %v1673
        %s1682 = sld [smem:[#allocation6 + $0x30]]
        %s1683 = sld [smem:[#allocation6 + $0xb0]]
        %v1684 = vstv %s1682
        %v1685 = vstv %s1683
        %v1686 = vsel %vm408, %v1684, %v1685
        %v1687 = vmul.f32 %v402, %v1686
        %v1688 = vmul.f32 %v398, %v1686
        %v1689 = vmul.f32 %v403, %v1686
        %1693 = vrot.lane.b32.xlu0 %v1687, 32
        %v1694 = vpop.permute.xlu0 %1693
        %1695 = vrot.lane.b32.xlu0 %v1688, 32
        %v1696 = vpop.permute.xlu0 %1695
        %1697 = vrot.lane.b32.xlu0 %v1689, 32
        %v1698 = vpop.permute.xlu0 %1697
        %v1699 = vsel %vm555, %v1694, %v1696
        %v1700 = vsel %vm555, %v1696, %v1698
        %v1704 = vadd.f32 %v1679, %v1699
        %v1705 = vadd.f32 %v1680, %v1700
        %v1706 = vadd.f32 %v1681, %v1698
        %v1707 = vlaneseq
        %v1708 = vshrl.u32 %v1707, 7
        %v1709 = vsub.s32 6, %v1708
        %v1710 = vrot.slane %v404, %v1709
        %v1711 = vlaneseq
        %v1712 = vshrl.u32 %v1711, 7
        %v1713 = vsub.s32 6, %v1712
        %v1714 = vrot.slane %v405, %v1713
        %1717 = vrot.lane.b32.xlu0 %v1710, 6
        %v1718 = vpop.permute.xlu0 %1717
        %1719 = vrot.lane.b32.xlu0 %v1714, 6
        %v1720 = vpop.permute.xlu0 %1719
        %vm1721 = vcmask 48128
        %v1722 = vsel %vm1721, %v1718, %v1720
        %v1726 = vmul.f32 %v1704, %v1718
        %v1727 = vmul.f32 %v1705, %v1722
        %v1728 = vmul.f32 %v1706, %v1720
        %1732 = vrot.lane.b32.xlu0 %v1726, 122
        %v1733 = vpop.permute.xlu0 %1732
        %1734 = vrot.lane.b32.xlu0 %v1727, 122
        %v1735 = vpop.permute.xlu0 %1734
        %1736 = vrot.lane.b32.xlu0 %v1728, 122
        %v1737 = vpop.permute.xlu0 %1736
        %vm1738 = vcmask 998400
        %v1739 = vsel %vm1738, %v1733, %v1735
        %v1740 = vsel %vm1738, %v1735, %v1737
        %v1743 = vadd.f32 %v1544, %v1739
        %v1744 = vadd.f32 %v1545, %v1740
        %v1747 = vrot.slane %v1743, 1
        %v1748 = vrot.slane %v1744, 1
        %v1751 = vadd.f32 %v1743, %v1747
        %v1752 = vadd.f32 %v1744, %v1748
        %v1753 = vxor.u32 %v1751, 2147483648
        %v1754 = vxor.u32 %v1752, 2147483648
        %v1755 = vmul.f32 %v1753, 1.442695
        %v1756 = vpow.pop %v1755
        %v1757 = vmul.f32 %v1754, 1.442695
        %v1758 = vpow.pop %v1757
        %v1759 = vadd.f32 %v1756, 1.0
        %v1760 = vadd.f32 %v1758, 1.0
        %v1761 = vrcp.pop %v1759
        %v1762 = vmul.f32 1.0, %v1761
        %v1763 = vrcp.pop %v1760
        %v1764 = vmul.f32 1.0, %v1763
        %v1765 = vlaneseq
        %v1766 = vshrl.u32 %v1765, 7
        %v1767 = vsub.s32 0, %v1766
        %v1768 = vrot.slane %v1762, %v1767
        %v1769 = vlaneseq
        %v1770 = vshrl.u32 %v1769, 7
        %v1771 = vsub.s32 0, %v1770
        %v1772 = vrot.slane %v1764, %v1771
        %v1773 = vmul.f32 %v1768, %v360
        %v1774 = vmul.f32 %v1772, %v361
        %v1775 = vadd.f32 %v1773, %v308
        %v1776 = vadd.f32 %v1774, %v309
        %1777 = vst [vmem:[%s298] sm:$0xff] %v1775
        %1778 = vst [vmem:[%s298 + $0x8] sm:$0xff] %v1776
        %s1779 = sand.u32 %s183, 1
        %s1780 = scalar_lea.sflag [#allocation4], %s1779
        %s1781 = sand.u32 %s183, 1
        %s1782 = smul.addr %s1781, 16
        %s1783 = scalar_lea.vmem [#allocation7], %s1782
        // Predicated region
        $region57: #{tpu_custom_call.1} parent=47 // pred_check
          %p1784 = pneg %p193
        $region58: #{tpu_custom_call.1} parent=47 // pred_check_branch
          %1786 = sbr.rel (%p1784) target = $region60
        $region59: #{tpu_custom_call.1} parent=47 // pred_region
          %s1788 = ssub.s32 256, 256
          %1789 = vsyncadd %s1780, %s1788
          %s1790 = smul.addr %s23, 2
          %s1791 = smul.addr %s1790, 128
          %s1792 = scalar_lea.hbm %s7, %s1791
          %s1794 = sshll.u32 %s1783, 4
          %s1795 = int_to_ptr.vmem [resolvable:$true] %s1794
          %1797 = dma.vmem_to_hbm [thread:$0]  %s1795, 256, %s1792, %s1780
        $region60: #{tpu_custom_call.1} parent=47 // pred_fallthru
          _
      $region48: #{tpu_custom_call.1} parent=5 // pred_fallthru
        _
      %p1798 = scmp.le.s32.totalorder 2, %s18
      // Predicated region
      $region61: #{tpu_custom_call.1} parent=5 // pred_check
        %p1799 = pneg %p1798
      $region62: #{tpu_custom_call.1} parent=5 // pred_check_branch
        %1801 = sbr.rel (%p1799) target = $region64
      $region63: #{tpu_custom_call.1} parent=5 // pred_region
        %s1802 = ssub.s32 %s18, 2
        // Predicated region
        $region65: #{tpu_custom_call.1} parent=63 // pred_check
          %p1803 = pneg %p199
        $region66: #{tpu_custom_call.1} parent=63 // pred_check_branch
          %1805 = sbr.rel (%p1803) target = $region68
        $region67: #{tpu_custom_call.1} parent=63 // pred_region
          %s1806 = sand.u32 %s184, 1
          %s1807 = scalar_lea.sflag [#allocation4], %s1806
          %s1808 = sand.u32 %s184, 1
          %s1809 = smul.addr %s1808, 16
          %s1810 = scalar_lea.vmem [#allocation7], %s1809
          %1811 = dma.done %s1807, 256
        $region68: #{tpu_custom_call.1} parent=63 // pred_fallthru
          _
      $region64: #{tpu_custom_call.1} parent=5 // pred_fallthru
        _
    $region6: #{tpu_custom_call.1} parent=1 // loop_footer
      %s22 = sadd.s32 1, %s18
    $region7: #{tpu_custom_call.1} parent=1 // loop_footer_branch
      %17 = sbr.rel target = $region3
    $region8: #{tpu_custom_call.1} parent=1 // loop_exit
      _
    %1812 = vsyncpa [#allocation3], 1
    %s1813 = scalar_lea.sflag [#allocation3], 1
    %1814 = vsyncpa %s1813, 1
    %1815 = vsyncpa [#allocation4], 1
    %s1816 = scalar_lea.sflag [#allocation4], 1
    %1817 = vsyncpa %s1816, 1
    %1818 = vsyncpa [#allocation5], 1
    %s1819 = scalar_lea.sflag [#allocation5], 1
    %1820 = vsyncpa %s1819, 1

</llo_original>
